<compile_context>
chip_gen: v5e
topology: v5e:2x2
jax: 0.10.0
libtpu: 0.0.40
codegen_flags: <defaults>
</compile_context>

<pallas_src>
import jax
import jax.numpy as jnp
from jax.experimental import pallas as pl
from jax.experimental.pallas import tpu as pltpu

# ---- small model config (distilgpt2-shaped, scaled down) -------------------
BATCH = 2
SEQ = 8
VOCAB = 128
D_MODEL = 64
N_HEADS = 2
HEAD_DIM = D_MODEL // N_HEADS
N_LAYERS = 2
D_FF = 4 * D_MODEL
LN_EPS = 1e-5
NEG_INF = -1e9
BT = BATCH * SEQ
BH = BATCH * N_HEADS


# ---- shared math helpers (usable both inside kernels and in the reference) -
def _layernorm(x, g, b):
    mu = jnp.mean(x, axis=-1, keepdims=True)
    var = jnp.mean((x - mu) ** 2, axis=-1, keepdims=True)
    return (x - mu) * jax.lax.rsqrt(var + LN_EPS) * g + b


def _gelu(x):
    # GPT-2 "gelu_new" (tanh approximation)
    c = 0.7978845608028654  # sqrt(2/pi)
    return 0.5 * x * (1.0 + jnp.tanh(c * (x + 0.044715 * x * x * x)))


def _bf16(x):
    return x.astype(jnp.bfloat16)


# ---- Pallas kernel: full LM forward + shifted CE loss (single invocation) --
def gpt_lm_loss_kernel(x_ref, bias_ref, tgt_ref, valid_ref,
                       ln1g_ref, ln1b_ref, wqkv_ref, bqkv_ref,
                       woh_ref, bo_ref, ln2g_ref, ln2b_ref,
                       wfc1_ref, bfc1_ref, wfc2_ref, bfc2_ref,
                       lnfg_ref, lnfb_ref, wteT_ref,
                       loss_ref):
    x = x_ref[...]                       # (B*T, D) f32, resident the whole time
    bias = bias_ref[...]                 # (B*H, T, T) additive causal+pad mask
    scale = 1.0 / (HEAD_DIM ** 0.5)

    def split_heads(m):                  # (B*T, D) -> (B*H, T, Dh)
        parts = []
        for b in range(BATCH):
            rows = m[b * SEQ:(b + 1) * SEQ, :]
            for h in range(N_HEADS):
                parts.append(rows[:, h * HEAD_DIM:(h + 1) * HEAD_DIM])
        return jnp.stack(parts, axis=0)

    for li in range(N_LAYERS):
        # --- attention sub-block (pre-LN) ---
        h1 = _layernorm(x, ln1g_ref[li], ln1b_ref[li])
        qkv = jnp.dot(_bf16(h1), wqkv_ref[li],
                      preferred_element_type=jnp.float32) + bqkv_ref[li]
        q = split_heads(qkv[:, 0:D_MODEL])
        k = split_heads(qkv[:, D_MODEL:2 * D_MODEL])
        v = split_heads(qkv[:, 2 * D_MODEL:3 * D_MODEL])

        # batched over all (batch, head) pairs; contraction on last dims
        # (no explicit transpose).
        s = jnp.einsum("xqd,xkd->xqk", _bf16(q), _bf16(k),
                       preferred_element_type=jnp.float32) * scale + bias
        s = s - jnp.max(s, axis=-1, keepdims=True)
        p = jnp.exp(s)
        p = p * pl.reciprocal(jnp.sum(p, axis=-1, keepdims=True), approx=True)
        o = jnp.einsum("xqk,xkd->xqd", _bf16(p), _bf16(v),
                       preferred_element_type=jnp.float32)    # (B*H, T, Dh)

        # output projection with per-(batch, head) weight blocks, then reduce
        # over heads and stack batches back to (B*T, D).
        proj = jnp.einsum("xtd,xde->xte", _bf16(o), woh_ref[li],
                          preferred_element_type=jnp.float32)  # (B*H, T, D)
        rows = []
        for b in range(BATCH):
            acc = proj[b * N_HEADS]
            for h in range(1, N_HEADS):
                acc = acc + proj[b * N_HEADS + h]
            rows.append(acc)
        x = x + jnp.concatenate(rows, axis=0) + bo_ref[li]

        # --- MLP sub-block (pre-LN) ---
        h2 = _layernorm(x, ln2g_ref[li], ln2b_ref[li])
        a = _gelu(jnp.dot(_bf16(h2), wfc1_ref[li],
                          preferred_element_type=jnp.float32) + bfc1_ref[li])
        x = x + jnp.dot(_bf16(a), wfc2_ref[li],
                        preferred_element_type=jnp.float32) + bfc2_ref[li]

    # --- final LN + tied LM head (pre-transposed (D, V)) + shifted CE -------
    hf = _layernorm(x, lnfg_ref[...], lnfb_ref[...])
    logits = jnp.dot(_bf16(hf), wteT_ref[...],
                     preferred_element_type=jnp.float32)          # (B*T, V)
    m = jnp.max(logits, axis=-1, keepdims=True)
    lse = m + jnp.log(jnp.sum(jnp.exp(logits - m), axis=-1, keepdims=True))
    col = jax.lax.broadcasted_iota(jnp.int32, logits.shape, 1)
    tgt_logit = jnp.sum(jnp.where(col == tgt_ref[...], logits, 0.0),
                        axis=-1, keepdims=True)                   # (B*T, 1)
    valid = valid_ref[...]
    # Note: only the shifted last position per row is dropped (labels == x,
    # no pad-label masking), matching HF GPT-2 semantics with labels=x.
    nll_sum = jnp.sum((lse - tgt_logit) * valid, keepdims=True)   # (1, 1)
    valid_sum = jnp.sum(valid, keepdims=True)                     # (1, 1)
    loss_ref[...] = nll_sum * pl.reciprocal(valid_sum, approx=True)


# ---- wrapper: pack weights, build masks, launch the single fused kernel ----
def _full_spec(arr):
    nd = arr.ndim
    return pl.BlockSpec(arr.shape, lambda i, _nd=nd: (0,) * _nd)


def _pack_params(params):
    """Stack per-layer weights (leading layer axis) and pre-arrange layouts."""
    def stack(name):
        return jnp.stack([ly[name] for ly in params["layers"]], axis=0)

    w_o = stack("w_o")                                            # (L, D, D)
    # per-(batch, head) output-projection blocks: (L, B*H, Dh, D)
    woh = w_o.reshape(N_LAYERS, N_HEADS, HEAD_DIM, D_MODEL)
    woh = jnp.broadcast_to(woh[:, None],
                           (N_LAYERS, BATCH, N_HEADS, HEAD_DIM, D_MODEL))
    woh = woh.reshape(N_LAYERS, BH, HEAD_DIM, D_MODEL)

    return dict(
        ln1_g=stack("ln1_g"), ln1_b=stack("ln1_b"),
        w_qkv=stack("w_qkv").astype(jnp.bfloat16), b_qkv=stack("b_qkv"),
        w_oh=woh.astype(jnp.bfloat16), b_o=stack("b_o"),
        ln2_g=stack("ln2_g"), ln2_b=stack("ln2_b"),
        w_fc1=stack("w_fc1").astype(jnp.bfloat16), b_fc1=stack("b_fc1"),
        w_fc2=stack("w_fc2").astype(jnp.bfloat16), b_fc2=stack("b_fc2"),
        lnf_g=params["lnf_g"], lnf_b=params["lnf_b"],
        wte_T=params["wte"].T.astype(jnp.bfloat16),               # (D, V)
    )


@jax.jit
def generator_forward(input_ids, attn_masks, params):
    """Returns mean shifted cross-entropy loss (scalar), like out.loss."""
    B, T = input_ids.shape
    packed = _pack_params(params)

    # glue: embedding gather (token + position)
    x0 = (params["wte"][input_ids] + params["wpe"][:T][None, :, :]
          ).astype(jnp.float32).reshape(B * T, D_MODEL)

    # glue: combined causal + padding additive bias, broadcast to (B*H, T, T)
    am = attn_masks.astype(jnp.float32)                           # (B, T)
    causal = jnp.arange(T)[None, :] <= jnp.arange(T)[:, None]     # (T, T)
    allow = causal[None, :, :] & (am[:, None, :] > 0.5)           # (B, T, T)
    bias = jnp.where(allow, 0.0, NEG_INF).astype(jnp.float32)
    bias = jnp.broadcast_to(bias[:, None],
                            (B, N_HEADS, T, T)).reshape(B * N_HEADS, T, T)

    # glue: label shift (labels == input_ids, HF GPT-2 shift semantics)
    tgt = jnp.concatenate(
        [input_ids[:, 1:], jnp.zeros((B, 1), jnp.int32)], axis=1
    ).astype(jnp.int32).reshape(B * T, 1)
    valid = jnp.concatenate(
        [jnp.ones((B, T - 1), jnp.float32), jnp.zeros((B, 1), jnp.float32)],
        axis=1).reshape(B * T, 1)

    args = (x0, bias, tgt, valid,
            packed["ln1_g"], packed["ln1_b"], packed["w_qkv"], packed["b_qkv"],
            packed["w_oh"], packed["b_o"], packed["ln2_g"], packed["ln2_b"],
            packed["w_fc1"], packed["b_fc1"], packed["w_fc2"], packed["b_fc2"],
            packed["lnf_g"], packed["lnf_b"], packed["wte_T"])

    loss = pl.pallas_call(
        gpt_lm_loss_kernel,
        out_shape=jax.ShapeDtypeStruct((1, 1), jnp.float32),
        grid=(1,),
        in_specs=[_full_spec(a) for a in args],
        out_specs=pl.BlockSpec((1, 1), lambda i: (0, 0)),
        compiler_params=pltpu.CompilerParams(
            dimension_semantics=("arbitrary",)),
    )(*args)
    return loss[0, 0]


# ---- pure-JAX reference (same math, f32 weights) for a correctness check ---
def reference_forward(input_ids, attn_masks, params):
    B, T = input_ids.shape
    x = params["wte"][input_ids] + params["wpe"][:T][None, :, :]
    am = attn_masks.astype(jnp.float32)                           # (B, T)
    attn_bias = (1.0 - am)[:, None, None, :] * NEG_INF            # (B,1,1,T)
    row = jnp.arange(T)[:, None]
    col = jnp.arange(T)[None, :]
    causal = col <= row
    scale = 1.0 / (HEAD_DIM ** 0.5)
    for layer in params["layers"]:
        h = _layernorm(x, layer["ln1_g"], layer["ln1_b"])
        qkv = h @ layer["w_qkv"] + layer["b_qkv"]
        q, k, v = jnp.split(qkv, 3, axis=-1)
        q = q.reshape(B, T, N_HEADS, HEAD_DIM).transpose(0, 2, 1, 3)
        k = k.reshape(B, T, N_HEADS, HEAD_DIM).transpose(0, 2, 1, 3)
        v = v.reshape(B, T, N_HEADS, HEAD_DIM).transpose(0, 2, 1, 3)
        s = jnp.einsum("bhqd,bhkd->bhqk", q, k) * scale + attn_bias
        s = jnp.where(causal[None, None], s, NEG_INF)
        p = jax.nn.softmax(s, axis=-1)
        o = jnp.einsum("bhqk,bhkd->bhqd", p, v)
        o = o.transpose(0, 2, 1, 3).reshape(B, T, D_MODEL)
        x = x + o @ layer["w_o"] + layer["b_o"]
        h2 = _layernorm(x, layer["ln2_g"], layer["ln2_b"])
        x = x + _gelu(h2 @ layer["w_fc1"] + layer["b_fc1"]) @ layer["w_fc2"] \
            + layer["b_fc2"]
    h = _layernorm(x, params["lnf_g"], params["lnf_b"])
    logits = h @ params["wte"].T                                  # (B,T,V)
    logp = jax.nn.log_softmax(logits, axis=-1)
    tgt = input_ids[:, 1:]
    nll = -jnp.take_along_axis(logp[:, :-1, :], tgt[..., None], axis=-1)
    return jnp.mean(nll)


# ---- deterministic parameter init -------------------------------------------
def init_params(key):
    std = 0.02
    n_w_per_layer = 4
    keys = jax.random.split(key, 2 + N_LAYERS * n_w_per_layer)
    wte = std * jax.random.normal(keys[0], (VOCAB, D_MODEL), jnp.float32)
    wpe = std * jax.random.normal(keys[1], (SEQ, D_MODEL), jnp.float32)
    layers = []
    for li in range(N_LAYERS):
        k = keys[2 + li * n_w_per_layer: 2 + (li + 1) * n_w_per_layer]
        layers.append(dict(
            ln1_g=jnp.ones((1, D_MODEL), jnp.float32),
            ln1_b=jnp.zeros((1, D_MODEL), jnp.float32),
            w_qkv=std * jax.random.normal(k[0], (D_MODEL, 3 * D_MODEL)),
            b_qkv=jnp.zeros((1, 3 * D_MODEL), jnp.float32),
            w_o=std * jax.random.normal(k[1], (D_MODEL, D_MODEL)),
            b_o=jnp.zeros((1, D_MODEL), jnp.float32),
            ln2_g=jnp.ones((1, D_MODEL), jnp.float32),
            ln2_b=jnp.zeros((1, D_MODEL), jnp.float32),
            w_fc1=std * jax.random.normal(k[2], (D_MODEL, D_FF)),
            b_fc1=jnp.zeros((1, D_FF), jnp.float32),
            w_fc2=std * jax.random.normal(k[3], (D_FF, D_MODEL)),
            b_fc2=jnp.zeros((1, D_MODEL), jnp.float32),
        ))
    return dict(
        wte=wte, wpe=wpe,
        lnf_g=jnp.ones((1, D_MODEL), jnp.float32),
        lnf_b=jnp.zeros((1, D_MODEL), jnp.float32),
        layers=layers,
    )


if __name__ == "__main__":
    key = jax.random.PRNGKey(0)
    k_par, k_ids = jax.random.split(key)
    params = init_params(k_par)

    input_ids = jax.random.randint(k_ids, (BATCH, SEQ), 0, VOCAB, jnp.int32)
    # right-padded attention mask (last two tokens of row 1 are padding)
    attn_masks = jnp.ones((BATCH, SEQ), jnp.int32)
    attn_masks = attn_masks.at[1, -2:].set(0)

    loss = generator_forward(input_ids, attn_masks, params)
    loss = jax.block_until_ready(loss)

    ref = reference_forward(input_ids, attn_masks, params)
    ref = jax.block_until_ready(ref)

    assert bool(jnp.isfinite(loss)), "loss is not finite"
    assert bool(jnp.allclose(loss, ref, rtol=5e-2, atol=5e-2)), (loss, ref)
    # TODO(synk): Generator.generate (top-k/top-p sampling loop) is a
    # sequential decoding procedure, not a single kernel; not implemented.
    print("KERNEL_OK")
</pallas_src>

<mosaic_0001>
module attributes {stable_mosaic.version = 11 : i64} {
  func.func @gpt_lm_loss_kernel(%arg0: i32, %arg1: memref<16x64xf32, #tpu.memory_space<vmem>>, %arg2: memref<4x8x8xf32, #tpu.memory_space<vmem>>, %arg3: memref<16x1xi32, #tpu.memory_space<vmem>>, %arg4: memref<16x1xf32, #tpu.memory_space<vmem>>, %arg5: memref<2x1x64xf32, #tpu.memory_space<vmem>>, %arg6: memref<2x1x64xf32, #tpu.memory_space<vmem>>, %arg7: memref<2x64x192xbf16, #tpu.memory_space<vmem>>, %arg8: memref<2x1x192xf32, #tpu.memory_space<vmem>>, %arg9: memref<2x4x32x64xbf16, #tpu.memory_space<vmem>>, %arg10: memref<2x1x64xf32, #tpu.memory_space<vmem>>, %arg11: memref<2x1x64xf32, #tpu.memory_space<vmem>>, %arg12: memref<2x1x64xf32, #tpu.memory_space<vmem>>, %arg13: memref<2x64x256xbf16, #tpu.memory_space<vmem>>, %arg14: memref<2x1x256xf32, #tpu.memory_space<vmem>>, %arg15: memref<2x256x64xbf16, #tpu.memory_space<vmem>>, %arg16: memref<2x1x64xf32, #tpu.memory_space<vmem>>, %arg17: memref<1x64xf32, #tpu.memory_space<vmem>>, %arg18: memref<1x64xf32, #tpu.memory_space<vmem>>, %arg19: memref<64x128xbf16, #tpu.memory_space<vmem>>, %arg20: memref<1x1xf32, #tpu.memory_space<vmem>>) attributes {dimension_semantics = [#tpu.dimension_semantics<arbitrary>], iteration_bounds = array<i64: 1>, scalar_prefetch = 0 : i64, scratch_operands = 0 : i64, tpu.core_type = #tpu.core_type<tc>, window_params = [{pipeline_mode = #tpu.pipeline_mode<synchronous>, transform_indices = @transform_0, window_bounds = array<i64: 16, 64>}, {pipeline_mode = #tpu.pipeline_mode<synchronous>, transform_indices = @transform_1, window_bounds = array<i64: 4, 8, 8>}, {pipeline_mode = #tpu.pipeline_mode<synchronous>, transform_indices = @transform_2, window_bounds = array<i64: 16, 1>}, {pipeline_mode = #tpu.pipeline_mode<synchronous>, transform_indices = @transform_3, window_bounds = array<i64: 16, 1>}, {pipeline_mode = #tpu.pipeline_mode<synchronous>, transform_indices = @transform_4, window_bounds = array<i64: 2, 1, 64>}, {pipeline_mode = #tpu.pipeline_mode<synchronous>, transform_indices = @transform_5, window_bounds = array<i64: 2, 1, 64>}, {pipeline_mode = #tpu.pipeline_mode<synchronous>, transform_indices = @transform_6, window_bounds = array<i64: 2, 64, 192>}, {pipeline_mode = #tpu.pipeline_mode<synchronous>, transform_indices = @transform_7, window_bounds = array<i64: 2, 1, 192>}, {pipeline_mode = #tpu.pipeline_mode<synchronous>, transform_indices = @transform_8, window_bounds = array<i64: 2, 4, 32, 64>}, {pipeline_mode = #tpu.pipeline_mode<synchronous>, transform_indices = @transform_9, window_bounds = array<i64: 2, 1, 64>}, {pipeline_mode = #tpu.pipeline_mode<synchronous>, transform_indices = @transform_10, window_bounds = array<i64: 2, 1, 64>}, {pipeline_mode = #tpu.pipeline_mode<synchronous>, transform_indices = @transform_11, window_bounds = array<i64: 2, 1, 64>}, {pipeline_mode = #tpu.pipeline_mode<synchronous>, transform_indices = @transform_12, window_bounds = array<i64: 2, 64, 256>}, {pipeline_mode = #tpu.pipeline_mode<synchronous>, transform_indices = @transform_13, window_bounds = array<i64: 2, 1, 256>}, {pipeline_mode = #tpu.pipeline_mode<synchronous>, transform_indices = @transform_14, window_bounds = array<i64: 2, 256, 64>}, {pipeline_mode = #tpu.pipeline_mode<synchronous>, transform_indices = @transform_15, window_bounds = array<i64: 2, 1, 64>}, {pipeline_mode = #tpu.pipeline_mode<synchronous>, transform_indices = @transform_16, window_bounds = array<i64: 1, 64>}, {pipeline_mode = #tpu.pipeline_mode<synchronous>, transform_indices = @transform_17, window_bounds = array<i64: 1, 64>}, {pipeline_mode = #tpu.pipeline_mode<synchronous>, transform_indices = @transform_18, window_bounds = array<i64: 64, 128>}, {pipeline_mode = #tpu.pipeline_mode<synchronous>, transform_indices = @transform_19, window_bounds = array<i64: 1, 1>}]} {
    %c0 = arith.constant 0 : index
    %c0_0 = arith.constant 0 : index
    %0 = vector.load %arg1[%c0, %c0_0] : memref<16x64xf32, #tpu.memory_space<vmem>>, vector<16x64xf32>
    %c0_1 = arith.constant 0 : index
    %c0_2 = arith.constant 0 : index
    %c0_3 = arith.constant 0 : index
    %1 = vector.load %arg2[%c0_1, %c0_2, %c0_3] : memref<4x8x8xf32, #tpu.memory_space<vmem>>, vector<4x8x8xf32>
    %c0_4 = arith.constant 0 : index
    %c0_5 = arith.constant 0 : index
    %c0_6 = arith.constant 0 : index
    %2 = vector.load %arg5[%c0_4, %c0_5, %c0_6] : memref<2x1x64xf32, #tpu.memory_space<vmem>>, vector<1x1x64xf32>
    %3 = vector.shape_cast %2 : vector<1x1x64xf32> to vector<1x64xf32>
    %c0_7 = arith.constant 0 : index
    %c0_8 = arith.constant 0 : index
    %c0_9 = arith.constant 0 : index
    %4 = vector.load %arg6[%c0_7, %c0_8, %c0_9] : memref<2x1x64xf32, #tpu.memory_space<vmem>>, vector<1x1x64xf32>
    %5 = vector.shape_cast %4 : vector<1x1x64xf32> to vector<1x64xf32>
    %cst = arith.constant dense<0.000000e+00> : vector<16xf32>
    %6 = vector.multi_reduction <add>, %0, %cst [1] : vector<16x64xf32> to vector<16xf32>
    %7 = vector.shape_cast %6 : vector<16xf32> to vector<16x1xf32>
    %cst_10 = arith.constant 6.400000e+01 : f32
    %8 = vector.broadcast %cst_10 : f32 to vector<16x1xf32>
    %9 = arith.divf %7, %8 : vector<16x1xf32>
    %10 = vector.broadcast %9 : vector<16x1xf32> to vector<16x64xf32>
    %11 = arith.subf %0, %10 : vector<16x64xf32>
    %12 = arith.mulf %11, %11 : vector<16x64xf32>
    %cst_11 = arith.constant dense<0.000000e+00> : vector<16xf32>
    %13 = vector.multi_reduction <add>, %12, %cst_11 [1] : vector<16x64xf32> to vector<16xf32>
    %14 = vector.shape_cast %13 : vector<16xf32> to vector<16x1xf32>
    %cst_12 = arith.constant 6.400000e+01 : f32
    %15 = vector.broadcast %cst_12 : f32 to vector<16x1xf32>
    %16 = arith.divf %14, %15 : vector<16x1xf32>
    %17 = vector.broadcast %9 : vector<16x1xf32> to vector<16x64xf32>
    %18 = arith.subf %0, %17 : vector<16x64xf32>
    %cst_13 = arith.constant 9.99999974E-6 : f32
    %19 = vector.broadcast %cst_13 : f32 to vector<16x1xf32>
    %20 = arith.addf %16, %19 : vector<16x1xf32>
    %21 = math.rsqrt %20 : vector<16x1xf32>
    %22 = vector.broadcast %21 : vector<16x1xf32> to vector<16x64xf32>
    %23 = arith.mulf %18, %22 : vector<16x64xf32>
    %24 = vector.broadcast %3 : vector<1x64xf32> to vector<16x64xf32>
    %25 = arith.mulf %23, %24 : vector<16x64xf32>
    %26 = vector.broadcast %5 : vector<1x64xf32> to vector<16x64xf32>
    %27 = arith.addf %25, %26 : vector<16x64xf32>
    %28 = arith.truncf %27 : vector<16x64xf32> to vector<16x64xbf16>
    %c0_14 = arith.constant 0 : index
    %c0_15 = arith.constant 0 : index
    %c0_16 = arith.constant 0 : index
    %29 = vector.load %arg7[%c0_14, %c0_15, %c0_16] : memref<2x64x192xbf16, #tpu.memory_space<vmem>>, vector<1x64x192xbf16>
    %30 = vector.shape_cast %29 : vector<1x64x192xbf16> to vector<64x192xbf16>
    %cst_17 = arith.constant dense<0.000000e+00> : vector<16x192xf32>
    %31 = tpu.matmul %28, %30, %cst_17 {dimension_numbers = #tpu.dot_dimension_numbers<[1], [0], [0], [1], [0, 0, 1, 1], [], []>} : vector<16x64xbf16>, vector<64x192xbf16>, vector<16x192xf32> -> vector<16x192xf32>
    %c0_18 = arith.constant 0 : index
    %c0_19 = arith.constant 0 : index
    %c0_20 = arith.constant 0 : index
    %32 = vector.load %arg8[%c0_18, %c0_19, %c0_20] : memref<2x1x192xf32, #tpu.memory_space<vmem>>, vector<1x1x192xf32>
    %33 = vector.shape_cast %32 : vector<1x1x192xf32> to vector<1x192xf32>
    %34 = vector.broadcast %33 : vector<1x192xf32> to vector<16x192xf32>
    %35 = arith.addf %31, %34 : vector<16x192xf32>
    %36 = vector.extract_strided_slice %35 {offsets = [0, 0], sizes = [16, 64], strides = [1, 1]} : vector<16x192xf32> to vector<16x64xf32>
    %37 = vector.extract_strided_slice %36 {offsets = [0, 0], sizes = [8, 64], strides = [1, 1]} : vector<16x64xf32> to vector<8x64xf32>
    %38 = vector.extract_strided_slice %37 {offsets = [0, 0], sizes = [8, 32], strides = [1, 1]} : vector<8x64xf32> to vector<8x32xf32>
    %39 = vector.extract_strided_slice %37 {offsets = [0, 32], sizes = [8, 32], strides = [1, 1]} : vector<8x64xf32> to vector<8x32xf32>
    %40 = vector.extract_strided_slice %36 {offsets = [8, 0], sizes = [8, 64], strides = [1, 1]} : vector<16x64xf32> to vector<8x64xf32>
    %41 = vector.extract_strided_slice %40 {offsets = [0, 0], sizes = [8, 32], strides = [1, 1]} : vector<8x64xf32> to vector<8x32xf32>
    %42 = vector.extract_strided_slice %40 {offsets = [0, 32], sizes = [8, 32], strides = [1, 1]} : vector<8x64xf32> to vector<8x32xf32>
    %43 = vector.shape_cast %38 : vector<8x32xf32> to vector<1x8x32xf32>
    %44 = vector.shape_cast %39 : vector<8x32xf32> to vector<1x8x32xf32>
    %45 = vector.shape_cast %41 : vector<8x32xf32> to vector<1x8x32xf32>
    %46 = vector.shape_cast %42 : vector<8x32xf32> to vector<1x8x32xf32>
    %47 = tpu.concatenate %43, %44, %45, %46 in 0 : vector<1x8x32xf32>, vector<1x8x32xf32>, vector<1x8x32xf32>, vector<1x8x32xf32> -> vector<4x8x32xf32>
    %48 = vector.extract_strided_slice %35 {offsets = [0, 64], sizes = [16, 64], strides = [1, 1]} : vector<16x192xf32> to vector<16x64xf32>
    %49 = vector.extract_strided_slice %48 {offsets = [0, 0], sizes = [8, 64], strides = [1, 1]} : vector<16x64xf32> to vector<8x64xf32>
    %50 = vector.extract_strided_slice %49 {offsets = [0, 0], sizes = [8, 32], strides = [1, 1]} : vector<8x64xf32> to vector<8x32xf32>
    %51 = vector.extract_strided_slice %49 {offsets = [0, 32], sizes = [8, 32], strides = [1, 1]} : vector<8x64xf32> to vector<8x32xf32>
    %52 = vector.extract_strided_slice %48 {offsets = [8, 0], sizes = [8, 64], strides = [1, 1]} : vector<16x64xf32> to vector<8x64xf32>
    %53 = vector.extract_strided_slice %52 {offsets = [0, 0], sizes = [8, 32], strides = [1, 1]} : vector<8x64xf32> to vector<8x32xf32>
    %54 = vector.extract_strided_slice %52 {offsets = [0, 32], sizes = [8, 32], strides = [1, 1]} : vector<8x64xf32> to vector<8x32xf32>
    %55 = vector.shape_cast %50 : vector<8x32xf32> to vector<1x8x32xf32>
    %56 = vector.shape_cast %51 : vector<8x32xf32> to vector<1x8x32xf32>
    %57 = vector.shape_cast %53 : vector<8x32xf32> to vector<1x8x32xf32>
    %58 = vector.shape_cast %54 : vector<8x32xf32> to vector<1x8x32xf32>
    %59 = tpu.concatenate %55, %56, %57, %58 in 0 : vector<1x8x32xf32>, vector<1x8x32xf32>, vector<1x8x32xf32>, vector<1x8x32xf32> -> vector<4x8x32xf32>
    %60 = vector.extract_strided_slice %35 {offsets = [0, 128], sizes = [16, 64], strides = [1, 1]} : vector<16x192xf32> to vector<16x64xf32>
    %61 = vector.extract_strided_slice %60 {offsets = [0, 0], sizes = [8, 64], strides = [1, 1]} : vector<16x64xf32> to vector<8x64xf32>
    %62 = vector.extract_strided_slice %61 {offsets = [0, 0], sizes = [8, 32], strides = [1, 1]} : vector<8x64xf32> to vector<8x32xf32>
    %63 = vector.extract_strided_slice %61 {offsets = [0, 32], sizes = [8, 32], strides = [1, 1]} : vector<8x64xf32> to vector<8x32xf32>
    %64 = vector.extract_strided_slice %60 {offsets = [8, 0], sizes = [8, 64], strides = [1, 1]} : vector<16x64xf32> to vector<8x64xf32>
    %65 = vector.extract_strided_slice %64 {offsets = [0, 0], sizes = [8, 32], strides = [1, 1]} : vector<8x64xf32> to vector<8x32xf32>
    %66 = vector.extract_strided_slice %64 {offsets = [0, 32], sizes = [8, 32], strides = [1, 1]} : vector<8x64xf32> to vector<8x32xf32>
    %67 = vector.shape_cast %62 : vector<8x32xf32> to vector<1x8x32xf32>
    %68 = vector.shape_cast %63 : vector<8x32xf32> to vector<1x8x32xf32>
    %69 = vector.shape_cast %65 : vector<8x32xf32> to vector<1x8x32xf32>
    %70 = vector.shape_cast %66 : vector<8x32xf32> to vector<1x8x32xf32>
    %71 = tpu.concatenate %67, %68, %69, %70 in 0 : vector<1x8x32xf32>, vector<1x8x32xf32>, vector<1x8x32xf32>, vector<1x8x32xf32> -> vector<4x8x32xf32>
    %72 = arith.truncf %47 : vector<4x8x32xf32> to vector<4x8x32xbf16>
    %73 = arith.truncf %59 : vector<4x8x32xf32> to vector<4x8x32xbf16>
    "tpu.trace_start"() <{level = 10 : i32, message = "xqd,xkd->xqk"}> : () -> ()
    %cst_21 = arith.constant dense<0.000000e+00> : vector<4x8x8xf32>
    %74 = tpu.matmul %72, %73, %cst_21 {dimension_numbers = #tpu.dot_dimension_numbers<[2], [2], [1], [1], [0, 0, 0, 1, 1, 1], [0], [0]>} : vector<4x8x32xbf16>, vector<4x8x32xbf16>, vector<4x8x8xf32> -> vector<4x8x8xf32>
    "tpu.trace_stop"() : () -> ()
    %cst_22 = arith.constant 0.176776692 : f32
    %75 = vector.broadcast %cst_22 : f32 to vector<4x8x8xf32>
    %76 = arith.mulf %74, %75 : vector<4x8x8xf32>
    %77 = arith.addf %76, %1 : vector<4x8x8xf32>
    %cst_23 = arith.constant dense<0xFF800000> : vector<4x8xf32>
    %78 = vector.multi_reduction <maximumf>, %77, %cst_23 [2] : vector<4x8x8xf32> to vector<4x8xf32>
    %79 = vector.shape_cast %78 : vector<4x8xf32> to vector<4x8x1xf32>
    %80 = vector.broadcast %79 : vector<4x8x1xf32> to vector<4x8x8xf32>
    %81 = arith.subf %77, %80 : vector<4x8x8xf32>
    %82 = math.exp %81 : vector<4x8x8xf32>
    %cst_24 = arith.constant dense<0.000000e+00> : vector<4x8xf32>
    %83 = vector.multi_reduction <add>, %82, %cst_24 [2] : vector<4x8x8xf32> to vector<4x8xf32>
    %84 = vector.shape_cast %83 : vector<4x8xf32> to vector<4x8x1xf32>
    %85 = tpu.reciprocal %84 {approx = true} : vector<4x8x1xf32> -> vector<4x8x1xf32>
    %86 = vector.broadcast %85 : vector<4x8x1xf32> to vector<4x8x8xf32>
    %87 = arith.mulf %82, %86 : vector<4x8x8xf32>
    %88 = arith.truncf %87 : vector<4x8x8xf32> to vector<4x8x8xbf16>
    %89 = arith.truncf %71 : vector<4x8x32xf32> to vector<4x8x32xbf16>
    "tpu.trace_start"() <{level = 10 : i32, message = "xqk,xkd->xqd"}> : () -> ()
    %cst_25 = arith.constant dense<0.000000e+00> : vector<4x8x32xf32>
    %90 = tpu.matmul %88, %89, %cst_25 {dimension_numbers = #tpu.dot_dimension_numbers<[2], [1], [1], [2], [0, 0, 0, 1, 1, 2], [0], [0]>} : vector<4x8x8xbf16>, vector<4x8x32xbf16>, vector<4x8x32xf32> -> vector<4x8x32xf32>
    "tpu.trace_stop"() : () -> ()
    %91 = arith.truncf %90 : vector<4x8x32xf32> to vector<4x8x32xbf16>
    %c0_26 = arith.constant 0 : index
    %c0_27 = arith.constant 0 : index
    %c0_28 = arith.constant 0 : index
    %c0_29 = arith.constant 0 : index
    %92 = vector.load %arg9[%c0_26, %c0_27, %c0_28, %c0_29] : memref<2x4x32x64xbf16, #tpu.memory_space<vmem>>, vector<1x4x32x64xbf16>
    %93 = vector.shape_cast %92 : vector<1x4x32x64xbf16> to vector<4x32x64xbf16>
    "tpu.trace_start"() <{level = 10 : i32, message = "xtd,xde->xte"}> : () -> ()
    %cst_30 = arith.constant dense<0.000000e+00> : vector<4x8x64xf32>
    %94 = tpu.matmul %91, %93, %cst_30 {dimension_numbers = #tpu.dot_dimension_numbers<[2], [1], [1], [2], [0, 0, 0, 1, 1, 2], [0], [0]>} : vector<4x8x32xbf16>, vector<4x32x64xbf16>, vector<4x8x64xf32> -> vector<4x8x64xf32>
    "tpu.trace_stop"() : () -> ()
    %95 = vector.extract_strided_slice %94 {offsets = [0, 0, 0], sizes = [1, 8, 64], strides = [1, 1, 1]} : vector<4x8x64xf32> to vector<1x8x64xf32>
    %96 = vector.shape_cast %95 : vector<1x8x64xf32> to vector<8x64xf32>
    %97 = vector.extract_strided_slice %94 {offsets = [1, 0, 0], sizes = [1, 8, 64], strides = [1, 1, 1]} : vector<4x8x64xf32> to vector<1x8x64xf32>
    %98 = vector.shape_cast %97 : vector<1x8x64xf32> to vector<8x64xf32>
    %99 = arith.addf %96, %98 : vector<8x64xf32>
    %100 = vector.extract_strided_slice %94 {offsets = [2, 0, 0], sizes = [1, 8, 64], strides = [1, 1, 1]} : vector<4x8x64xf32> to vector<1x8x64xf32>
    %101 = vector.shape_cast %100 : vector<1x8x64xf32> to vector<8x64xf32>
    %102 = vector.extract_strided_slice %94 {offsets = [3, 0, 0], sizes = [1, 8, 64], strides = [1, 1, 1]} : vector<4x8x64xf32> to vector<1x8x64xf32>
    %103 = vector.shape_cast %102 : vector<1x8x64xf32> to vector<8x64xf32>
    %104 = arith.addf %101, %103 : vector<8x64xf32>
    %105 = tpu.concatenate %99, %104 in 0 : vector<8x64xf32>, vector<8x64xf32> -> vector<16x64xf32>
    %106 = arith.addf %0, %105 : vector<16x64xf32>
    %c0_31 = arith.constant 0 : index
    %c0_32 = arith.constant 0 : index
    %c0_33 = arith.constant 0 : index
    %107 = vector.load %arg10[%c0_31, %c0_32, %c0_33] : memref<2x1x64xf32, #tpu.memory_space<vmem>>, vector<1x1x64xf32>
    %108 = vector.shape_cast %107 : vector<1x1x64xf32> to vector<1x64xf32>
    %109 = vector.broadcast %108 : vector<1x64xf32> to vector<16x64xf32>
    %110 = arith.addf %106, %109 : vector<16x64xf32>
    %c0_34 = arith.constant 0 : index
    %c0_35 = arith.constant 0 : index
    %c0_36 = arith.constant 0 : index
    %111 = vector.load %arg11[%c0_34, %c0_35, %c0_36] : memref<2x1x64xf32, #tpu.memory_space<vmem>>, vector<1x1x64xf32>
    %112 = vector.shape_cast %111 : vector<1x1x64xf32> to vector<1x64xf32>
    %c0_37 = arith.constant 0 : index
    %c0_38 = arith.constant 0 : index
    %c0_39 = arith.constant 0 : index
    %113 = vector.load %arg12[%c0_37, %c0_38, %c0_39] : memref<2x1x64xf32, #tpu.memory_space<vmem>>, vector<1x1x64xf32>
    %114 = vector.shape_cast %113 : vector<1x1x64xf32> to vector<1x64xf32>
    %cst_40 = arith.constant dense<0.000000e+00> : vector<16xf32>
    %115 = vector.multi_reduction <add>, %110, %cst_40 [1] : vector<16x64xf32> to vector<16xf32>
    %116 = vector.shape_cast %115 : vector<16xf32> to vector<16x1xf32>
    %cst_41 = arith.constant 6.400000e+01 : f32
    %117 = vector.broadcast %cst_41 : f32 to vector<16x1xf32>
    %118 = arith.divf %116, %117 : vector<16x1xf32>
    %119 = vector.broadcast %118 : vector<16x1xf32> to vector<16x64xf32>
    %120 = arith.subf %110, %119 : vector<16x64xf32>
    %121 = arith.mulf %120, %120 : vector<16x64xf32>
    %cst_42 = arith.constant dense<0.000000e+00> : vector<16xf32>
    %122 = vector.multi_reduction <add>, %121, %cst_42 [1] : vector<16x64xf32> to vector<16xf32>
    %123 = vector.shape_cast %122 : vector<16xf32> to vector<16x1xf32>
    %cst_43 = arith.constant 6.400000e+01 : f32
    %124 = vector.broadcast %cst_43 : f32 to vector<16x1xf32>
    %125 = arith.divf %123, %124 : vector<16x1xf32>
    %126 = vector.broadcast %118 : vector<16x1xf32> to vector<16x64xf32>
    %127 = arith.subf %110, %126 : vector<16x64xf32>
    %cst_44 = arith.constant 9.99999974E-6 : f32
    %128 = vector.broadcast %cst_44 : f32 to vector<16x1xf32>
    %129 = arith.addf %125, %128 : vector<16x1xf32>
    %130 = math.rsqrt %129 : vector<16x1xf32>
    %131 = vector.broadcast %130 : vector<16x1xf32> to vector<16x64xf32>
    %132 = arith.mulf %127, %131 : vector<16x64xf32>
    %133 = vector.broadcast %112 : vector<1x64xf32> to vector<16x64xf32>
    %134 = arith.mulf %132, %133 : vector<16x64xf32>
    %135 = vector.broadcast %114 : vector<1x64xf32> to vector<16x64xf32>
    %136 = arith.addf %134, %135 : vector<16x64xf32>
    %137 = arith.truncf %136 : vector<16x64xf32> to vector<16x64xbf16>
    %c0_45 = arith.constant 0 : index
    %c0_46 = arith.constant 0 : index
    %c0_47 = arith.constant 0 : index
    %138 = vector.load %arg13[%c0_45, %c0_46, %c0_47] : memref<2x64x256xbf16, #tpu.memory_space<vmem>>, vector<1x64x256xbf16>
    %139 = vector.shape_cast %138 : vector<1x64x256xbf16> to vector<64x256xbf16>
    %cst_48 = arith.constant dense<0.000000e+00> : vector<16x256xf32>
    %140 = tpu.matmul %137, %139, %cst_48 {dimension_numbers = #tpu.dot_dimension_numbers<[1], [0], [0], [1], [0, 0, 1, 1], [], []>} : vector<16x64xbf16>, vector<64x256xbf16>, vector<16x256xf32> -> vector<16x256xf32>
    %c0_49 = arith.constant 0 : index
    %c0_50 = arith.constant 0 : index
    %c0_51 = arith.constant 0 : index
    %141 = vector.load %arg14[%c0_49, %c0_50, %c0_51] : memref<2x1x256xf32, #tpu.memory_space<vmem>>, vector<1x1x256xf32>
    %142 = vector.shape_cast %141 : vector<1x1x256xf32> to vector<1x256xf32>
    %143 = vector.broadcast %142 : vector<1x256xf32> to vector<16x256xf32>
    %144 = arith.addf %140, %143 : vector<16x256xf32>
    %cst_52 = arith.constant 5.000000e-01 : f32
    %145 = vector.broadcast %cst_52 : f32 to vector<16x256xf32>
    %146 = arith.mulf %145, %144 : vector<16x256xf32>
    %cst_53 = arith.constant 4.471500e-02 : f32
    %147 = vector.broadcast %cst_53 : f32 to vector<16x256xf32>
    %148 = arith.mulf %147, %144 : vector<16x256xf32>
    %149 = arith.mulf %148, %144 : vector<16x256xf32>
    %150 = arith.mulf %149, %144 : vector<16x256xf32>
    %151 = arith.addf %144, %150 : vector<16x256xf32>
    %cst_54 = arith.constant 0.797884583 : f32
    %152 = vector.broadcast %cst_54 : f32 to vector<16x256xf32>
    %153 = arith.mulf %152, %151 : vector<16x256xf32>
    %154 = math.tanh %153 : vector<16x256xf32>
    %cst_55 = arith.constant 1.000000e+00 : f32
    %155 = vector.broadcast %cst_55 : f32 to vector<16x256xf32>
    %156 = arith.addf %155, %154 : vector<16x256xf32>
    %157 = arith.mulf %146, %156 : vector<16x256xf32>
    %158 = arith.truncf %157 : vector<16x256xf32> to vector<16x256xbf16>
    %c0_56 = arith.constant 0 : index
    %c0_57 = arith.constant 0 : index
    %c0_58 = arith.constant 0 : index
    %159 = vector.load %arg15[%c0_56, %c0_57, %c0_58] : memref<2x256x64xbf16, #tpu.memory_space<vmem>>, vector<1x256x64xbf16>
    %160 = vector.shape_cast %159 : vector<1x256x64xbf16> to vector<256x64xbf16>
    %cst_59 = arith.constant dense<0.000000e+00> : vector<16x64xf32>
    %161 = tpu.matmul %158, %160, %cst_59 {dimension_numbers = #tpu.dot_dimension_numbers<[1], [0], [0], [1], [0, 0, 1, 1], [], []>} : vector<16x256xbf16>, vector<256x64xbf16>, vector<16x64xf32> -> vector<16x64xf32>
    %162 = arith.addf %110, %161 : vector<16x64xf32>
    %c0_60 = arith.constant 0 : index
    %c0_61 = arith.constant 0 : index
    %c0_62 = arith.constant 0 : index
    %163 = vector.load %arg16[%c0_60, %c0_61, %c0_62] : memref<2x1x64xf32, #tpu.memory_space<vmem>>, vector<1x1x64xf32>
    %164 = vector.shape_cast %163 : vector<1x1x64xf32> to vector<1x64xf32>
    %165 = vector.broadcast %164 : vector<1x64xf32> to vector<16x64xf32>
    %166 = arith.addf %162, %165 : vector<16x64xf32>
    %c1 = arith.constant 1 : index
    %c0_63 = arith.constant 0 : index
    %c0_64 = arith.constant 0 : index
    %167 = vector.load %arg5[%c1, %c0_63, %c0_64] : memref<2x1x64xf32, #tpu.memory_space<vmem>>, vector<1x1x64xf32>
    %168 = vector.shape_cast %167 : vector<1x1x64xf32> to vector<1x64xf32>
    %c1_65 = arith.constant 1 : index
    %c0_66 = arith.constant 0 : index
    %c0_67 = arith.constant 0 : index
    %169 = vector.load %arg6[%c1_65, %c0_66, %c0_67] : memref<2x1x64xf32, #tpu.memory_space<vmem>>, vector<1x1x64xf32>
    %170 = vector.shape_cast %169 : vector<1x1x64xf32> to vector<1x64xf32>
    %cst_68 = arith.constant dense<0.000000e+00> : vector<16xf32>
    %171 = vector.multi_reduction <add>, %166, %cst_68 [1] : vector<16x64xf32> to vector<16xf32>
    %172 = vector.shape_cast %171 : vector<16xf32> to vector<16x1xf32>
    %cst_69 = arith.constant 6.400000e+01 : f32
    %173 = vector.broadcast %cst_69 : f32 to vector<16x1xf32>
    %174 = arith.divf %172, %173 : vector<16x1xf32>
    %175 = vector.broadcast %174 : vector<16x1xf32> to vector<16x64xf32>
    %176 = arith.subf %166, %175 : vector<16x64xf32>
    %177 = arith.mulf %176, %176 : vector<16x64xf32>
    %cst_70 = arith.constant dense<0.000000e+00> : vector<16xf32>
    %178 = vector.multi_reduction <add>, %177, %cst_70 [1] : vector<16x64xf32> to vector<16xf32>
    %179 = vector.shape_cast %178 : vector<16xf32> to vector<16x1xf32>
    %cst_71 = arith.constant 6.400000e+01 : f32
    %180 = vector.broadcast %cst_71 : f32 to vector<16x1xf32>
    %181 = arith.divf %179, %180 : vector<16x1xf32>
    %182 = vector.broadcast %174 : vector<16x1xf32> to vector<16x64xf32>
    %183 = arith.subf %166, %182 : vector<16x64xf32>
    %cst_72 = arith.constant 9.99999974E-6 : f32
    %184 = vector.broadcast %cst_72 : f32 to vector<16x1xf32>
    %185 = arith.addf %181, %184 : vector<16x1xf32>
    %186 = math.rsqrt %185 : vector<16x1xf32>
    %187 = vector.broadcast %186 : vector<16x1xf32> to vector<16x64xf32>
    %188 = arith.mulf %183, %187 : vector<16x64xf32>
    %189 = vector.broadcast %168 : vector<1x64xf32> to vector<16x64xf32>
    %190 = arith.mulf %188, %189 : vector<16x64xf32>
    %191 = vector.broadcast %170 : vector<1x64xf32> to vector<16x64xf32>
    %192 = arith.addf %190, %191 : vector<16x64xf32>
    %193 = arith.truncf %192 : vector<16x64xf32> to vector<16x64xbf16>
    %c1_73 = arith.constant 1 : index
    %c0_74 = arith.constant 0 : index
    %c0_75 = arith.constant 0 : index
    %194 = vector.load %arg7[%c1_73, %c0_74, %c0_75] : memref<2x64x192xbf16, #tpu.memory_space<vmem>>, vector<1x64x192xbf16>
    %195 = vector.shape_cast %194 : vector<1x64x192xbf16> to vector<64x192xbf16>
    %cst_76 = arith.constant dense<0.000000e+00> : vector<16x192xf32>
    %196 = tpu.matmul %193, %195, %cst_76 {dimension_numbers = #tpu.dot_dimension_numbers<[1], [0], [0], [1], [0, 0, 1, 1], [], []>} : vector<16x64xbf16>, vector<64x192xbf16>, vector<16x192xf32> -> vector<16x192xf32>
    %c1_77 = arith.constant 1 : index
    %c0_78 = arith.constant 0 : index
    %c0_79 = arith.constant 0 : index
    %197 = vector.load %arg8[%c1_77, %c0_78, %c0_79] : memref<2x1x192xf32, #tpu.memory_space<vmem>>, vector<1x1x192xf32>
    %198 = vector.shape_cast %197 : vector<1x1x192xf32> to vector<1x192xf32>
    %199 = vector.broadcast %198 : vector<1x192xf32> to vector<16x192xf32>
    %200 = arith.addf %196, %199 : vector<16x192xf32>
    %201 = vector.extract_strided_slice %200 {offsets = [0, 0], sizes = [16, 64], strides = [1, 1]} : vector<16x192xf32> to vector<16x64xf32>
    %202 = vector.extract_strided_slice %201 {offsets = [0, 0], sizes = [8, 64], strides = [1, 1]} : vector<16x64xf32> to vector<8x64xf32>
    %203 = vector.extract_strided_slice %202 {offsets = [0, 0], sizes = [8, 32], strides = [1, 1]} : vector<8x64xf32> to vector<8x32xf32>
    %204 = vector.extract_strided_slice %202 {offsets = [0, 32], sizes = [8, 32], strides = [1, 1]} : vector<8x64xf32> to vector<8x32xf32>
    %205 = vector.extract_strided_slice %201 {offsets = [8, 0], sizes = [8, 64], strides = [1, 1]} : vector<16x64xf32> to vector<8x64xf32>
    %206 = vector.extract_strided_slice %205 {offsets = [0, 0], sizes = [8, 32], strides = [1, 1]} : vector<8x64xf32> to vector<8x32xf32>
    %207 = vector.extract_strided_slice %205 {offsets = [0, 32], sizes = [8, 32], strides = [1, 1]} : vector<8x64xf32> to vector<8x32xf32>
    %208 = vector.shape_cast %203 : vector<8x32xf32> to vector<1x8x32xf32>
    %209 = vector.shape_cast %204 : vector<8x32xf32> to vector<1x8x32xf32>
    %210 = vector.shape_cast %206 : vector<8x32xf32> to vector<1x8x32xf32>
    %211 = vector.shape_cast %207 : vector<8x32xf32> to vector<1x8x32xf32>
    %212 = tpu.concatenate %208, %209, %210, %211 in 0 : vector<1x8x32xf32>, vector<1x8x32xf32>, vector<1x8x32xf32>, vector<1x8x32xf32> -> vector<4x8x32xf32>
    %213 = vector.extract_strided_slice %200 {offsets = [0, 64], sizes = [16, 64], strides = [1, 1]} : vector<16x192xf32> to vector<16x64xf32>
    %214 = vector.extract_strided_slice %213 {offsets = [0, 0], sizes = [8, 64], strides = [1, 1]} : vector<16x64xf32> to vector<8x64xf32>
    %215 = vector.extract_strided_slice %214 {offsets = [0, 0], sizes = [8, 32], strides = [1, 1]} : vector<8x64xf32> to vector<8x32xf32>
    %216 = vector.extract_strided_slice %214 {offsets = [0, 32], sizes = [8, 32], strides = [1, 1]} : vector<8x64xf32> to vector<8x32xf32>
    %217 = vector.extract_strided_slice %213 {offsets = [8, 0], sizes = [8, 64], strides = [1, 1]} : vector<16x64xf32> to vector<8x64xf32>
    %218 = vector.extract_strided_slice %217 {offsets = [0, 0], sizes = [8, 32], strides = [1, 1]} : vector<8x64xf32> to vector<8x32xf32>
    %219 = vector.extract_strided_slice %217 {offsets = [0, 32], sizes = [8, 32], strides = [1, 1]} : vector<8x64xf32> to vector<8x32xf32>
    %220 = vector.shape_cast %215 : vector<8x32xf32> to vector<1x8x32xf32>
    %221 = vector.shape_cast %216 : vector<8x32xf32> to vector<1x8x32xf32>
    %222 = vector.shape_cast %218 : vector<8x32xf32> to vector<1x8x32xf32>
    %223 = vector.shape_cast %219 : vector<8x32xf32> to vector<1x8x32xf32>
    %224 = tpu.concatenate %220, %221, %222, %223 in 0 : vector<1x8x32xf32>, vector<1x8x32xf32>, vector<1x8x32xf32>, vector<1x8x32xf32> -> vector<4x8x32xf32>
    %225 = vector.extract_strided_slice %200 {offsets = [0, 128], sizes = [16, 64], strides = [1, 1]} : vector<16x192xf32> to vector<16x64xf32>
    %226 = vector.extract_strided_slice %225 {offsets = [0, 0], sizes = [8, 64], strides = [1, 1]} : vector<16x64xf32> to vector<8x64xf32>
    %227 = vector.extract_strided_slice %226 {offsets = [0, 0], sizes = [8, 32], strides = [1, 1]} : vector<8x64xf32> to vector<8x32xf32>
    %228 = vector.extract_strided_slice %226 {offsets = [0, 32], sizes = [8, 32], strides = [1, 1]} : vector<8x64xf32> to vector<8x32xf32>
    %229 = vector.extract_strided_slice %225 {offsets = [8, 0], sizes = [8, 64], strides = [1, 1]} : vector<16x64xf32> to vector<8x64xf32>
    %230 = vector.extract_strided_slice %229 {offsets = [0, 0], sizes = [8, 32], strides = [1, 1]} : vector<8x64xf32> to vector<8x32xf32>
    %231 = vector.extract_strided_slice %229 {offsets = [0, 32], sizes = [8, 32], strides = [1, 1]} : vector<8x64xf32> to vector<8x32xf32>
    %232 = vector.shape_cast %227 : vector<8x32xf32> to vector<1x8x32xf32>
    %233 = vector.shape_cast %228 : vector<8x32xf32> to vector<1x8x32xf32>
    %234 = vector.shape_cast %230 : vector<8x32xf32> to vector<1x8x32xf32>
    %235 = vector.shape_cast %231 : vector<8x32xf32> to vector<1x8x32xf32>
    %236 = tpu.concatenate %232, %233, %234, %235 in 0 : vector<1x8x32xf32>, vector<1x8x32xf32>, vector<1x8x32xf32>, vector<1x8x32xf32> -> vector<4x8x32xf32>
    %237 = arith.truncf %212 : vector<4x8x32xf32> to vector<4x8x32xbf16>
    %238 = arith.truncf %224 : vector<4x8x32xf32> to vector<4x8x32xbf16>
    "tpu.trace_start"() <{level = 10 : i32, message = "xqd,xkd->xqk"}> : () -> ()
    %cst_80 = arith.constant dense<0.000000e+00> : vector<4x8x8xf32>
    %239 = tpu.matmul %237, %238, %cst_80 {dimension_numbers = #tpu.dot_dimension_numbers<[2], [2], [1], [1], [0, 0, 0, 1, 1, 1], [0], [0]>} : vector<4x8x32xbf16>, vector<4x8x32xbf16>, vector<4x8x8xf32> -> vector<4x8x8xf32>
    "tpu.trace_stop"() : () -> ()
    %cst_81 = arith.constant 0.176776692 : f32
    %240 = vector.broadcast %cst_81 : f32 to vector<4x8x8xf32>
    %241 = arith.mulf %239, %240 : vector<4x8x8xf32>
    %242 = arith.addf %241, %1 : vector<4x8x8xf32>
    %cst_82 = arith.constant dense<0xFF800000> : vector<4x8xf32>
    %243 = vector.multi_reduction <maximumf>, %242, %cst_82 [2] : vector<4x8x8xf32> to vector<4x8xf32>
    %244 = vector.shape_cast %243 : vector<4x8xf32> to vector<4x8x1xf32>
    %245 = vector.broadcast %244 : vector<4x8x1xf32> to vector<4x8x8xf32>
    %246 = arith.subf %242, %245 : vector<4x8x8xf32>
    %247 = math.exp %246 : vector<4x8x8xf32>
    %cst_83 = arith.constant dense<0.000000e+00> : vector<4x8xf32>
    %248 = vector.multi_reduction <add>, %247, %cst_83 [2] : vector<4x8x8xf32> to vector<4x8xf32>
    %249 = vector.shape_cast %248 : vector<4x8xf32> to vector<4x8x1xf32>
    %250 = tpu.reciprocal %249 {approx = true} : vector<4x8x1xf32> -> vector<4x8x1xf32>
    %251 = vector.broadcast %250 : vector<4x8x1xf32> to vector<4x8x8xf32>
    %252 = arith.mulf %247, %251 : vector<4x8x8xf32>
    %253 = arith.truncf %252 : vector<4x8x8xf32> to vector<4x8x8xbf16>
    %254 = arith.truncf %236 : vector<4x8x32xf32> to vector<4x8x32xbf16>
    "tpu.trace_start"() <{level = 10 : i32, message = "xqk,xkd->xqd"}> : () -> ()
    %cst_84 = arith.constant dense<0.000000e+00> : vector<4x8x32xf32>
    %255 = tpu.matmul %253, %254, %cst_84 {dimension_numbers = #tpu.dot_dimension_numbers<[2], [1], [1], [2], [0, 0, 0, 1, 1, 2], [0], [0]>} : vector<4x8x8xbf16>, vector<4x8x32xbf16>, vector<4x8x32xf32> -> vector<4x8x32xf32>
    "tpu.trace_stop"() : () -> ()
    %256 = arith.truncf %255 : vector<4x8x32xf32> to vector<4x8x32xbf16>
    %c1_85 = arith.constant 1 : index
    %c0_86 = arith.constant 0 : index
    %c0_87 = arith.constant 0 : index
    %c0_88 = arith.constant 0 : index
    %257 = vector.load %arg9[%c1_85, %c0_86, %c0_87, %c0_88] : memref<2x4x32x64xbf16, #tpu.memory_space<vmem>>, vector<1x4x32x64xbf16>
    %258 = vector.shape_cast %257 : vector<1x4x32x64xbf16> to vector<4x32x64xbf16>
    "tpu.trace_start"() <{level = 10 : i32, message = "xtd,xde->xte"}> : () -> ()
    %cst_89 = arith.constant dense<0.000000e+00> : vector<4x8x64xf32>
    %259 = tpu.matmul %256, %258, %cst_89 {dimension_numbers = #tpu.dot_dimension_numbers<[2], [1], [1], [2], [0, 0, 0, 1, 1, 2], [0], [0]>} : vector<4x8x32xbf16>, vector<4x32x64xbf16>, vector<4x8x64xf32> -> vector<4x8x64xf32>
    "tpu.trace_stop"() : () -> ()
    %260 = vector.extract_strided_slice %259 {offsets = [0, 0, 0], sizes = [1, 8, 64], strides = [1, 1, 1]} : vector<4x8x64xf32> to vector<1x8x64xf32>
    %261 = vector.shape_cast %260 : vector<1x8x64xf32> to vector<8x64xf32>
    %262 = vector.extract_strided_slice %259 {offsets = [1, 0, 0], sizes = [1, 8, 64], strides = [1, 1, 1]} : vector<4x8x64xf32> to vector<1x8x64xf32>
    %263 = vector.shape_cast %262 : vector<1x8x64xf32> to vector<8x64xf32>
    %264 = arith.addf %261, %263 : vector<8x64xf32>
    %265 = vector.extract_strided_slice %259 {offsets = [2, 0, 0], sizes = [1, 8, 64], strides = [1, 1, 1]} : vector<4x8x64xf32> to vector<1x8x64xf32>
    %266 = vector.shape_cast %265 : vector<1x8x64xf32> to vector<8x64xf32>
    %267 = vector.extract_strided_slice %259 {offsets = [3, 0, 0], sizes = [1, 8, 64], strides = [1, 1, 1]} : vector<4x8x64xf32> to vector<1x8x64xf32>
    %268 = vector.shape_cast %267 : vector<1x8x64xf32> to vector<8x64xf32>
    %269 = arith.addf %266, %268 : vector<8x64xf32>
    %270 = tpu.concatenate %264, %269 in 0 : vector<8x64xf32>, vector<8x64xf32> -> vector<16x64xf32>
    %271 = arith.addf %166, %270 : vector<16x64xf32>
    %c1_90 = arith.constant 1 : index
    %c0_91 = arith.constant 0 : index
    %c0_92 = arith.constant 0 : index
    %272 = vector.load %arg10[%c1_90, %c0_91, %c0_92] : memref<2x1x64xf32, #tpu.memory_space<vmem>>, vector<1x1x64xf32>
    %273 = vector.shape_cast %272 : vector<1x1x64xf32> to vector<1x64xf32>
    %274 = vector.broadcast %273 : vector<1x64xf32> to vector<16x64xf32>
    %275 = arith.addf %271, %274 : vector<16x64xf32>
    %c1_93 = arith.constant 1 : index
    %c0_94 = arith.constant 0 : index
    %c0_95 = arith.constant 0 : index
    %276 = vector.load %arg11[%c1_93, %c0_94, %c0_95] : memref<2x1x64xf32, #tpu.memory_space<vmem>>, vector<1x1x64xf32>
    %277 = vector.shape_cast %276 : vector<1x1x64xf32> to vector<1x64xf32>
    %c1_96 = arith.constant 1 : index
    %c0_97 = arith.constant 0 : index
    %c0_98 = arith.constant 0 : index
    %278 = vector.load %arg12[%c1_96, %c0_97, %c0_98] : memref<2x1x64xf32, #tpu.memory_space<vmem>>, vector<1x1x64xf32>
    %279 = vector.shape_cast %278 : vector<1x1x64xf32> to vector<1x64xf32>
    %cst_99 = arith.constant dense<0.000000e+00> : vector<16xf32>
    %280 = vector.multi_reduction <add>, %275, %cst_99 [1] : vector<16x64xf32> to vector<16xf32>
    %281 = vector.shape_cast %280 : vector<16xf32> to vector<16x1xf32>
    %cst_100 = arith.constant 6.400000e+01 : f32
    %282 = vector.broadcast %cst_100 : f32 to vector<16x1xf32>
    %283 = arith.divf %281, %282 : vector<16x1xf32>
    %284 = vector.broadcast %283 : vector<16x1xf32> to vector<16x64xf32>
    %285 = arith.subf %275, %284 : vector<16x64xf32>
    %286 = arith.mulf %285, %285 : vector<16x64xf32>
    %cst_101 = arith.constant dense<0.000000e+00> : vector<16xf32>
    %287 = vector.multi_reduction <add>, %286, %cst_101 [1] : vector<16x64xf32> to vector<16xf32>
    %288 = vector.shape_cast %287 : vector<16xf32> to vector<16x1xf32>
    %cst_102 = arith.constant 6.400000e+01 : f32
    %289 = vector.broadcast %cst_102 : f32 to vector<16x1xf32>
    %290 = arith.divf %288, %289 : vector<16x1xf32>
    %291 = vector.broadcast %283 : vector<16x1xf32> to vector<16x64xf32>
    %292 = arith.subf %275, %291 : vector<16x64xf32>
    %cst_103 = arith.constant 9.99999974E-6 : f32
    %293 = vector.broadcast %cst_103 : f32 to vector<16x1xf32>
    %294 = arith.addf %290, %293 : vector<16x1xf32>
    %295 = math.rsqrt %294 : vector<16x1xf32>
    %296 = vector.broadcast %295 : vector<16x1xf32> to vector<16x64xf32>
    %297 = arith.mulf %292, %296 : vector<16x64xf32>
    %298 = vector.broadcast %277 : vector<1x64xf32> to vector<16x64xf32>
    %299 = arith.mulf %297, %298 : vector<16x64xf32>
    %300 = vector.broadcast %279 : vector<1x64xf32> to vector<16x64xf32>
    %301 = arith.addf %299, %300 : vector<16x64xf32>
    %302 = arith.truncf %301 : vector<16x64xf32> to vector<16x64xbf16>
    %c1_104 = arith.constant 1 : index
    %c0_105 = arith.constant 0 : index
    %c0_106 = arith.constant 0 : index
    %303 = vector.load %arg13[%c1_104, %c0_105, %c0_106] : memref<2x64x256xbf16, #tpu.memory_space<vmem>>, vector<1x64x256xbf16>
    %304 = vector.shape_cast %303 : vector<1x64x256xbf16> to vector<64x256xbf16>
    %cst_107 = arith.constant dense<0.000000e+00> : vector<16x256xf32>
    %305 = tpu.matmul %302, %304, %cst_107 {dimension_numbers = #tpu.dot_dimension_numbers<[1], [0], [0], [1], [0, 0, 1, 1], [], []>} : vector<16x64xbf16>, vector<64x256xbf16>, vector<16x256xf32> -> vector<16x256xf32>
    %c1_108 = arith.constant 1 : index
    %c0_109 = arith.constant 0 : index
    %c0_110 = arith.constant 0 : index
    %306 = vector.load %arg14[%c1_108, %c0_109, %c0_110] : memref<2x1x256xf32, #tpu.memory_space<vmem>>, vector<1x1x256xf32>
    %307 = vector.shape_cast %306 : vector<1x1x256xf32> to vector<1x256xf32>
    %308 = vector.broadcast %307 : vector<1x256xf32> to vector<16x256xf32>
    %309 = arith.addf %305, %308 : vector<16x256xf32>
    %cst_111 = arith.constant 5.000000e-01 : f32
    %310 = vector.broadcast %cst_111 : f32 to vector<16x256xf32>
    %311 = arith.mulf %310, %309 : vector<16x256xf32>
    %cst_112 = arith.constant 4.471500e-02 : f32
    %312 = vector.broadcast %cst_112 : f32 to vector<16x256xf32>
    %313 = arith.mulf %312, %309 : vector<16x256xf32>
    %314 = arith.mulf %313, %309 : vector<16x256xf32>
    %315 = arith.mulf %314, %309 : vector<16x256xf32>
    %316 = arith.addf %309, %315 : vector<16x256xf32>
    %cst_113 = arith.constant 0.797884583 : f32
    %317 = vector.broadcast %cst_113 : f32 to vector<16x256xf32>
    %318 = arith.mulf %317, %316 : vector<16x256xf32>
    %319 = math.tanh %318 : vector<16x256xf32>
    %cst_114 = arith.constant 1.000000e+00 : f32
    %320 = vector.broadcast %cst_114 : f32 to vector<16x256xf32>
    %321 = arith.addf %320, %319 : vector<16x256xf32>
    %322 = arith.mulf %311, %321 : vector<16x256xf32>
    %323 = arith.truncf %322 : vector<16x256xf32> to vector<16x256xbf16>
    %c1_115 = arith.constant 1 : index
    %c0_116 = arith.constant 0 : index
    %c0_117 = arith.constant 0 : index
    %324 = vector.load %arg15[%c1_115, %c0_116, %c0_117] : memref<2x256x64xbf16, #tpu.memory_space<vmem>>, vector<1x256x64xbf16>
    %325 = vector.shape_cast %324 : vector<1x256x64xbf16> to vector<256x64xbf16>
    %cst_118 = arith.constant dense<0.000000e+00> : vector<16x64xf32>
    %326 = tpu.matmul %323, %325, %cst_118 {dimension_numbers = #tpu.dot_dimension_numbers<[1], [0], [0], [1], [0, 0, 1, 1], [], []>} : vector<16x256xbf16>, vector<256x64xbf16>, vector<16x64xf32> -> vector<16x64xf32>
    %327 = arith.addf %275, %326 : vector<16x64xf32>
    %c1_119 = arith.constant 1 : index
    %c0_120 = arith.constant 0 : index
    %c0_121 = arith.constant 0 : index
    %328 = vector.load %arg16[%c1_119, %c0_120, %c0_121] : memref<2x1x64xf32, #tpu.memory_space<vmem>>, vector<1x1x64xf32>
    %329 = vector.shape_cast %328 : vector<1x1x64xf32> to vector<1x64xf32>
    %330 = vector.broadcast %329 : vector<1x64xf32> to vector<16x64xf32>
    %331 = arith.addf %327, %330 : vector<16x64xf32>
    %c0_122 = arith.constant 0 : index
    %c0_123 = arith.constant 0 : index
    %332 = vector.load %arg17[%c0_122, %c0_123] : memref<1x64xf32, #tpu.memory_space<vmem>>, vector<1x64xf32>
    %c0_124 = arith.constant 0 : index
    %c0_125 = arith.constant 0 : index
    %333 = vector.load %arg18[%c0_124, %c0_125] : memref<1x64xf32, #tpu.memory_space<vmem>>, vector<1x64xf32>
    %cst_126 = arith.constant dense<0.000000e+00> : vector<16xf32>
    %334 = vector.multi_reduction <add>, %331, %cst_126 [1] : vector<16x64xf32> to vector<16xf32>
    %335 = vector.shape_cast %334 : vector<16xf32> to vector<16x1xf32>
    %cst_127 = arith.constant 6.400000e+01 : f32
    %336 = vector.broadcast %cst_127 : f32 to vector<16x1xf32>
    %337 = arith.divf %335, %336 : vector<16x1xf32>
    %338 = vector.broadcast %337 : vector<16x1xf32> to vector<16x64xf32>
    %339 = arith.subf %331, %338 : vector<16x64xf32>
    %340 = arith.mulf %339, %339 : vector<16x64xf32>
    %cst_128 = arith.constant dense<0.000000e+00> : vector<16xf32>
    %341 = vector.multi_reduction <add>, %340, %cst_128 [1] : vector<16x64xf32> to vector<16xf32>
    %342 = vector.shape_cast %341 : vector<16xf32> to vector<16x1xf32>
    %cst_129 = arith.constant 6.400000e+01 : f32
    %343 = vector.broadcast %cst_129 : f32 to vector<16x1xf32>
    %344 = arith.divf %342, %343 : vector<16x1xf32>
    %345 = vector.broadcast %337 : vector<16x1xf32> to vector<16x64xf32>
    %346 = arith.subf %331, %345 : vector<16x64xf32>
    %cst_130 = arith.constant 9.99999974E-6 : f32
    %347 = vector.broadcast %cst_130 : f32 to vector<16x1xf32>
    %348 = arith.addf %344, %347 : vector<16x1xf32>
    %349 = math.rsqrt %348 : vector<16x1xf32>
    %350 = vector.broadcast %349 : vector<16x1xf32> to vector<16x64xf32>
    %351 = arith.mulf %346, %350 : vector<16x64xf32>
    %352 = vector.broadcast %332 : vector<1x64xf32> to vector<16x64xf32>
    %353 = arith.mulf %351, %352 : vector<16x64xf32>
    %354 = vector.broadcast %333 : vector<1x64xf32> to vector<16x64xf32>
    %355 = arith.addf %353, %354 : vector<16x64xf32>
    %356 = arith.truncf %355 : vector<16x64xf32> to vector<16x64xbf16>
    %c0_131 = arith.constant 0 : index
    %c0_132 = arith.constant 0 : index
    %357 = vector.load %arg19[%c0_131, %c0_132] : memref<64x128xbf16, #tpu.memory_space<vmem>>, vector<64x128xbf16>
    %cst_133 = arith.constant dense<0.000000e+00> : vector<16x128xf32>
    %358 = tpu.matmul %356, %357, %cst_133 {dimension_numbers = #tpu.dot_dimension_numbers<[1], [0], [0], [1], [0, 0, 1, 1], [], []>} : vector<16x64xbf16>, vector<64x128xbf16>, vector<16x128xf32> -> vector<16x128xf32>
    %cst_134 = arith.constant dense<0xFF800000> : vector<16xf32>
    %359 = vector.multi_reduction <maximumf>, %358, %cst_134 [1] : vector<16x128xf32> to vector<16xf32>
    %360 = vector.shape_cast %359 : vector<16xf32> to vector<16x1xf32>
    %361 = vector.broadcast %360 : vector<16x1xf32> to vector<16x128xf32>
    %362 = arith.subf %358, %361 : vector<16x128xf32>
    %363 = math.exp %362 : vector<16x128xf32>
    %cst_135 = arith.constant dense<0.000000e+00> : vector<16xf32>
    %364 = vector.multi_reduction <add>, %363, %cst_135 [1] : vector<16x128xf32> to vector<16xf32>
    %365 = vector.shape_cast %364 : vector<16xf32> to vector<16x1xf32>
    %366 = math.log %365 : vector<16x1xf32>
    %367 = arith.addf %360, %366 : vector<16x1xf32>
    %368 = tpu.iota {dimensions = array<i32: 1>} : vector<16x128xi32>
    %c0_136 = arith.constant 0 : index
    %c0_137 = arith.constant 0 : index
    %369 = vector.load %arg3[%c0_136, %c0_137] : memref<16x1xi32, #tpu.memory_space<vmem>>, vector<16x1xi32>
    %370 = vector.broadcast %369 : vector<16x1xi32> to vector<16x128xi32>
    %371 = arith.cmpi eq, %368, %370 : vector<16x128xi32>
    %cst_138 = arith.constant 0.000000e+00 : f32
    %372 = vector.broadcast %cst_138 : f32 to vector<16x128xf32>
    %373 = arith.select %371, %358, %372 : vector<16x128xi1>, vector<16x128xf32>
    %cst_139 = arith.constant dense<0.000000e+00> : vector<16xf32>
    %374 = vector.multi_reduction <add>, %373, %cst_139 [1] : vector<16x128xf32> to vector<16xf32>
    %375 = vector.shape_cast %374 : vector<16xf32> to vector<16x1xf32>
    %c0_140 = arith.constant 0 : index
    %c0_141 = arith.constant 0 : index
    %376 = vector.load %arg4[%c0_140, %c0_141] : memref<16x1xf32, #tpu.memory_space<vmem>>, vector<16x1xf32>
    %377 = arith.subf %367, %375 : vector<16x1xf32>
    %378 = arith.mulf %377, %376 : vector<16x1xf32>
    %379 = vector.shape_cast %378 : vector<16x1xf32> to vector<1x16x1xf32>
    %cst_142 = arith.constant dense<0.000000e+00> : vector<1xf32>
    %380 = vector.multi_reduction <add>, %379, %cst_142 [1, 2] : vector<1x16x1xf32> to vector<1xf32>
    %381 = vector.shape_cast %380 : vector<1xf32> to vector<1x1x1xf32>
    %382 = vector.extract %381[0, 0, 0] : f32 from vector<1x1x1xf32>
    %383 = vector.broadcast %382 : f32 to vector<1x1xf32>
    %384 = vector.shape_cast %376 : vector<16x1xf32> to vector<1x16x1xf32>
    %cst_143 = arith.constant dense<0.000000e+00> : vector<1xf32>
    %385 = vector.multi_reduction <add>, %384, %cst_143 [1, 2] : vector<1x16x1xf32> to vector<1xf32>
    %386 = vector.shape_cast %385 : vector<1xf32> to vector<1x1x1xf32>
    %387 = vector.extract %386[0, 0, 0] : f32 from vector<1x1x1xf32>
    %388 = vector.broadcast %387 : f32 to vector<1x1xf32>
    %389 = tpu.reciprocal %388 {approx = true} : vector<1x1xf32> -> vector<1x1xf32>
    %390 = arith.mulf %383, %389 : vector<1x1xf32>
    %c0_144 = arith.constant 0 : index
    %c0_145 = arith.constant 0 : index
    %391 = vector.load %arg20[%c0_144, %c0_145] : memref<1x1xf32, #tpu.memory_space<vmem>>, vector<1x1xf32>
    tpu.vector_store %arg20[%c0_144, %c0_145], %390 {strides = array<i32>} : memref<1x1xf32, #tpu.memory_space<vmem>>, vector<1x1xf32>,
    return
  }
  func.func @transform_0(%arg0: i32) -> (i32, i32) {
    %c0_i32 = arith.constant 0 : i32
    %c0_i32_0 = arith.constant 0 : i32
    %c0_i32_1 = arith.constant 0 : i32
    return %c0_i32, %c0_i32_0 : i32, i32
  }
  func.func @transform_1(%arg0: i32) -> (i32, i32, i32) {
    %c0_i32 = arith.constant 0 : i32
    %c0_i32_0 = arith.constant 0 : i32
    %c0_i32_1 = arith.constant 0 : i32
    %c0_i32_2 = arith.constant 0 : i32
    return %c0_i32, %c0_i32_0, %c0_i32_1 : i32, i32, i32
  }
  func.func @transform_2(%arg0: i32) -> (i32, i32) {
    %c0_i32 = arith.constant 0 : i32
    %c0_i32_0 = arith.constant 0 : i32
    %c0_i32_1 = arith.constant 0 : i32
    return %c0_i32, %c0_i32_0 : i32, i32
  }
  func.func @transform_3(%arg0: i32) -> (i32, i32) {
    %c0_i32 = arith.constant 0 : i32
    %c0_i32_0 = arith.constant 0 : i32
    %c0_i32_1 = arith.constant 0 : i32
    return %c0_i32, %c0_i32_0 : i32, i32
  }
  func.func @transform_4(%arg0: i32) -> (i32, i32, i32) {
    %c0_i32 = arith.constant 0 : i32
    %c0_i32_0 = arith.constant 0 : i32
    %c0_i32_1 = arith.constant 0 : i32
    %c0_i32_2 = arith.constant 0 : i32
    return %c0_i32, %c0_i32_0, %c0_i32_1 : i32, i32, i32
  }
  func.func @transform_5(%arg0: i32) -> (i32, i32, i32) {
    %c0_i32 = arith.constant 0 : i32
    %c0_i32_0 = arith.constant 0 : i32
    %c0_i32_1 = arith.constant 0 : i32
    %c0_i32_2 = arith.constant 0 : i32
    return %c0_i32, %c0_i32_0, %c0_i32_1 : i32, i32, i32
  }
  func.func @transform_6(%arg0: i32) -> (i32, i32, i32) {
    %c0_i32 = arith.constant 0 : i32
    %c0_i32_0 = arith.constant 0 : i32
    %c0_i32_1 = arith.constant 0 : i32
    %c0_i32_2 = arith.constant 0 : i32
    return %c0_i32, %c0_i32_0, %c0_i32_1 : i32, i32, i32
  }
  func.func @transform_7(%arg0: i32) -> (i32, i32, i32) {
    %c0_i32 = arith.constant 0 : i32
    %c0_i32_0 = arith.constant 0 : i32
    %c0_i32_1 = arith.constant 0 : i32
    %c0_i32_2 = arith.constant 0 : i32
    return %c0_i32, %c0_i32_0, %c0_i32_1 : i32, i32, i32
  }
  func.func @transform_8(%arg0: i32) -> (i32, i32, i32, i32) {
    %c0_i32 = arith.constant 0 : i32
    %c0_i32_0 = arith.constant 0 : i32
    %c0_i32_1 = arith.constant 0 : i32
    %c0_i32_2 = arith.constant 0 : i32
    %c0_i32_3 = arith.constant 0 : i32
    return %c0_i32, %c0_i32_0, %c0_i32_1, %c0_i32_2 : i32, i32, i32, i32
  }
  func.func @transform_9(%arg0: i32) -> (i32, i32, i32) {
    %c0_i32 = arith.constant 0 : i32
    %c0_i32_0 = arith.constant 0 : i32
    %c0_i32_1 = arith.constant 0 : i32
    %c0_i32_2 = arith.constant 0 : i32
    return %c0_i32, %c0_i32_0, %c0_i32_1 : i32, i32, i32
  }
  func.func @transform_10(%arg0: i32) -> (i32, i32, i32) {
    %c0_i32 = arith.constant 0 : i32
    %c0_i32_0 = arith.constant 0 : i32
    %c0_i32_1 = arith.constant 0 : i32
    %c0_i32_2 = arith.constant 0 : i32
    return %c0_i32, %c0_i32_0, %c0_i32_1 : i32, i32, i32
  }
  func.func @transform_11(%arg0: i32) -> (i32, i32, i32) {
    %c0_i32 = arith.constant 0 : i32
    %c0_i32_0 = arith.constant 0 : i32
    %c0_i32_1 = arith.constant 0 : i32
    %c0_i32_2 = arith.constant 0 : i32
    return %c0_i32, %c0_i32_0, %c0_i32_1 : i32, i32, i32
  }
  func.func @transform_12(%arg0: i32) -> (i32, i32, i32) {
    %c0_i32 = arith.constant 0 : i32
    %c0_i32_0 = arith.constant 0 : i32
    %c0_i32_1 = arith.constant 0 : i32
    %c0_i32_2 = arith.constant 0 : i32
    return %c0_i32, %c0_i32_0, %c0_i32_1 : i32, i32, i32
  }
  func.func @transform_13(%arg0: i32) -> (i32, i32, i32) {
    %c0_i32 = arith.constant 0 : i32
    %c0_i32_0 = arith.constant 0 : i32
    %c0_i32_1 = arith.constant 0 : i32
    %c0_i32_2 = arith.constant 0 : i32
    return %c0_i32, %c0_i32_0, %c0_i32_1 : i32, i32, i32
  }
  func.func @transform_14(%arg0: i32) -> (i32, i32, i32) {
    %c0_i32 = arith.constant 0 : i32
    %c0_i32_0 = arith.constant 0 : i32
    %c0_i32_1 = arith.constant 0 : i32
    %c0_i32_2 = arith.constant 0 : i32
    return %c0_i32, %c0_i32_0, %c0_i32_1 : i32, i32, i32
  }
  func.func @transform_15(%arg0: i32) -> (i32, i32, i32) {
    %c0_i32 = arith.constant 0 : i32
    %c0_i32_0 = arith.constant 0 : i32
    %c0_i32_1 = arith.constant 0 : i32
    %c0_i32_2 = arith.constant 0 : i32
    return %c0_i32, %c0_i32_0, %c0_i32_1 : i32, i32, i32
  }
  func.func @transform_16(%arg0: i32) -> (i32, i32) {
    %c0_i32 = arith.constant 0 : i32
    %c0_i32_0 = arith.constant 0 : i32
    %c0_i32_1 = arith.constant 0 : i32
    return %c0_i32, %c0_i32_0 : i32, i32
  }
  func.func @transform_17(%arg0: i32) -> (i32, i32) {
    %c0_i32 = arith.constant 0 : i32
    %c0_i32_0 = arith.constant 0 : i32
    %c0_i32_1 = arith.constant 0 : i32
    return %c0_i32, %c0_i32_0 : i32, i32
  }
  func.func @transform_18(%arg0: i32) -> (i32, i32) {
    %c0_i32 = arith.constant 0 : i32
    %c0_i32_0 = arith.constant 0 : i32
    %c0_i32_1 = arith.constant 0 : i32
    return %c0_i32, %c0_i32_0 : i32, i32
  }
  func.func @transform_19(%arg0: i32) -> (i32, i32) {
    %c0_i32 = arith.constant 0 : i32
    %c0_i32_0 = arith.constant 0 : i32
    %c0_i32_1 = arith.constant 0 : i32
    return %c0_i32, %c0_i32_0 : i32, i32
  }
}

</mosaic_0001>

<llo_original>
// kernel: generator_forward.1
$region0: #{generator_forward.1}
  #allocation0 [shape = 'u32[]', space=smem, size = 0x4, offset = 0x4, fixed_abs, tag = 'smem constant byte address 0x4 - core index']
  #allocation1 [shape = 'u32[72,128]{1,0:T(1,128)}', space=vmem, size = 0x9000, scoped, tag = 'internal scratch']
  %s0 = inlined_call_operand.vmem [shape: f32[16,64], index: 0, kind: input, shape index: {}]
  %s1 = inlined_call_operand.vmem [shape: f32[4,8,8], index: 1, kind: input, shape index: {}]
  %s2 = inlined_call_operand.vmem [shape: s32[16,1], index: 2, kind: input, shape index: {}]
  %s3 = inlined_call_operand.vmem [shape: f32[16,1], index: 3, kind: input, shape index: {}]
  %s4 = inlined_call_operand.vmem [shape: f32[2,1,64], index: 4, kind: input, shape index: {}]
  %s5 = inlined_call_operand.vmem [shape: f32[2,1,64], index: 5, kind: input, shape index: {}]
  %s6 = inlined_call_operand.vmem [shape: bf16[2,64,192], index: 6, kind: input, shape index: {}]
  %s7 = inlined_call_operand.vmem [shape: f32[2,1,192], index: 7, kind: input, shape index: {}]
  %s8 = inlined_call_operand.vmem [shape: bf16[2,4,32,64], index: 8, kind: input, shape index: {}]
  %s9 = inlined_call_operand.vmem [shape: f32[2,1,64], index: 9, kind: input, shape index: {}]
  %s10 = inlined_call_operand.vmem [shape: f32[2,1,64], index: 10, kind: input, shape index: {}]
  %s11 = inlined_call_operand.vmem [shape: f32[2,1,64], index: 11, kind: input, shape index: {}]
  %s12 = inlined_call_operand.vmem [shape: bf16[2,64,256], index: 12, kind: input, shape index: {}]
  %s13 = inlined_call_operand.vmem [shape: f32[2,1,256], index: 13, kind: input, shape index: {}]
  %s14 = inlined_call_operand.vmem [shape: bf16[2,256,64], index: 14, kind: input, shape index: {}]
  %s15 = inlined_call_operand.vmem [shape: f32[2,1,64], index: 15, kind: input, shape index: {}]
  %s16 = inlined_call_operand.vmem [shape: f32[1,64], index: 16, kind: input, shape index: {}]
  %s17 = inlined_call_operand.vmem [shape: f32[1,64], index: 17, kind: input, shape index: {}]
  %s18 = inlined_call_operand.vmem [shape: bf16[64,128], index: 18, kind: input, shape index: {}]
  %s19 = inlined_call_operand.hbm [shape: f32[1,1], index: 19, kind: output, shape index: {}]
  %s20 = sld [smem:[#allocation0]]
  $region86: #{generator_forward.1} parent=0
    _
  %s22 = ssub.s32 1, %s20
  %s23 = scalar_select 0, %s22, %s20
  $region1: #{generator_forward.1} parent=0
    #allocation2 [shape = 'u8[512]{0}', space=vmem, size = 0x400, scoped, tag = 'output window, operand 0, single buffered']
    #allocation3 [shape = 's32[1]{0}', space=sflag, size = 0x4, scoped, tag = 'scoped memory for generator_forward.1']
    %24 = vsyncpa [#allocation3], 0
    // Predicated region
    $region2: #{generator_forward.1} parent=1 // pred_check
      _
    $region3: #{generator_forward.1} parent=1 // pred_check_branch
      %26 = sbr.rel (0) target = $region5
    $region4: #{generator_forward.1} parent=1 // pred_region
      _
    $region5: #{generator_forward.1} parent=1 // pred_fallthru
      _
    // Predicated region
    $region6: #{generator_forward.1} parent=1 // pred_check
      _
    $region7: #{generator_forward.1} parent=1 // pred_check_branch
      %28 = sbr.rel (0) target = $region9
    $region8: #{generator_forward.1} parent=1 // pred_region
      _
    $region9: #{generator_forward.1} parent=1 // pred_fallthru
      _
    // Predicated region
    $region10: #{generator_forward.1} parent=1 // pred_check
      _
    $region11: #{generator_forward.1} parent=1 // pred_check_branch
      %30 = sbr.rel (0) target = $region13
    $region12: #{generator_forward.1} parent=1 // pred_region
      _
    $region13: #{generator_forward.1} parent=1 // pred_fallthru
      _
    // Predicated region
    $region14: #{generator_forward.1} parent=1 // pred_check
      _
    $region15: #{generator_forward.1} parent=1 // pred_check_branch
      %32 = sbr.rel (0) target = $region17
    $region16: #{generator_forward.1} parent=1 // pred_region
      _
    $region17: #{generator_forward.1} parent=1 // pred_fallthru
      _
    // Predicated region
    $region18: #{generator_forward.1} parent=1 // pred_check
      _
    $region19: #{generator_forward.1} parent=1 // pred_check_branch
      %34 = sbr.rel (0) target = $region21
    $region20: #{generator_forward.1} parent=1 // pred_region
      _
    $region21: #{generator_forward.1} parent=1 // pred_fallthru
      _
    // Predicated region
    $region22: #{generator_forward.1} parent=1 // pred_check
      _
    $region23: #{generator_forward.1} parent=1 // pred_check_branch
      %36 = sbr.rel (0) target = $region25
    $region24: #{generator_forward.1} parent=1 // pred_region
      _
    $region25: #{generator_forward.1} parent=1 // pred_fallthru
      _
    // Predicated region
    $region26: #{generator_forward.1} parent=1 // pred_check
      _
    $region27: #{generator_forward.1} parent=1 // pred_check_branch
      %38 = sbr.rel (0) target = $region29
    $region28: #{generator_forward.1} parent=1 // pred_region
      _
    $region29: #{generator_forward.1} parent=1 // pred_fallthru
      _
    // Predicated region
    $region30: #{generator_forward.1} parent=1 // pred_check
      _
    $region31: #{generator_forward.1} parent=1 // pred_check_branch
      %40 = sbr.rel (0) target = $region33
    $region32: #{generator_forward.1} parent=1 // pred_region
      _
    $region33: #{generator_forward.1} parent=1 // pred_fallthru
      _
    // Predicated region
    $region34: #{generator_forward.1} parent=1 // pred_check
      _
    $region35: #{generator_forward.1} parent=1 // pred_check_branch
      %42 = sbr.rel (0) target = $region37
    $region36: #{generator_forward.1} parent=1 // pred_region
      _
    $region37: #{generator_forward.1} parent=1 // pred_fallthru
      _
    // Predicated region
    $region38: #{generator_forward.1} parent=1 // pred_check
      _
    $region39: #{generator_forward.1} parent=1 // pred_check_branch
      %44 = sbr.rel (0) target = $region41
    $region40: #{generator_forward.1} parent=1 // pred_region
      _
    $region41: #{generator_forward.1} parent=1 // pred_fallthru
      _
    // Predicated region
    $region42: #{generator_forward.1} parent=1 // pred_check
      _
    $region43: #{generator_forward.1} parent=1 // pred_check_branch
      %46 = sbr.rel (0) target = $region45
    $region44: #{generator_forward.1} parent=1 // pred_region
      _
    $region45: #{generator_forward.1} parent=1 // pred_fallthru
      _
    // Predicated region
    $region46: #{generator_forward.1} parent=1 // pred_check
      _
    $region47: #{generator_forward.1} parent=1 // pred_check_branch
      %48 = sbr.rel (0) target = $region49
    $region48: #{generator_forward.1} parent=1 // pred_region
      _
    $region49: #{generator_forward.1} parent=1 // pred_fallthru
      _
    // Predicated region
    $region50: #{generator_forward.1} parent=1 // pred_check
      _
    $region51: #{generator_forward.1} parent=1 // pred_check_branch
      %50 = sbr.rel (0) target = $region53
    $region52: #{generator_forward.1} parent=1 // pred_region
      _
    $region53: #{generator_forward.1} parent=1 // pred_fallthru
      _
    // Predicated region
    $region54: #{generator_forward.1} parent=1 // pred_check
      _
    $region55: #{generator_forward.1} parent=1 // pred_check_branch
      %52 = sbr.rel (0) target = $region57
    $region56: #{generator_forward.1} parent=1 // pred_region
      _
    $region57: #{generator_forward.1} parent=1 // pred_fallthru
      _
    // Predicated region
    $region58: #{generator_forward.1} parent=1 // pred_check
      _
    $region59: #{generator_forward.1} parent=1 // pred_check_branch
      %54 = sbr.rel (0) target = $region61
    $region60: #{generator_forward.1} parent=1 // pred_region
      _
    $region61: #{generator_forward.1} parent=1 // pred_fallthru
      _
    // Predicated region
    $region62: #{generator_forward.1} parent=1 // pred_check
      _
    $region63: #{generator_forward.1} parent=1 // pred_check_branch
      %56 = sbr.rel (0) target = $region65
    $region64: #{generator_forward.1} parent=1 // pred_region
      _
    $region65: #{generator_forward.1} parent=1 // pred_fallthru
      _
    // Predicated region
    $region66: #{generator_forward.1} parent=1 // pred_check
      _
    $region67: #{generator_forward.1} parent=1 // pred_check_branch
      %58 = sbr.rel (0) target = $region69
    $region68: #{generator_forward.1} parent=1 // pred_region
      _
    $region69: #{generator_forward.1} parent=1 // pred_fallthru
      _
    // Predicated region
    $region70: #{generator_forward.1} parent=1 // pred_check
      _
    $region71: #{generator_forward.1} parent=1 // pred_check_branch
      %60 = sbr.rel (0) target = $region73
    $region72: #{generator_forward.1} parent=1 // pred_region
      _
    $region73: #{generator_forward.1} parent=1 // pred_fallthru
      _
    // Predicated region
    $region74: #{generator_forward.1} parent=1 // pred_check
      _
    $region75: #{generator_forward.1} parent=1 // pred_check_branch
      %62 = sbr.rel (0) target = $region77
    $region76: #{generator_forward.1} parent=1 // pred_region
      _
    $region77: #{generator_forward.1} parent=1 // pred_fallthru
      _
    %v64 = vld [vmem:[%s0] sm:$0xff]
    %v65 = vld [vmem:[%s0 + $0x8] sm:$0xff]
    %v66 = vld [vmem:[%s1] sm:$0xff]
    %v67 = vld [vmem:[%s1 + $0x8] sm:$0xff]
    %v68 = vld [vmem:[%s1 + $0x10] sm:$0xff]
    %v69 = vld [vmem:[%s1 + $0x18] sm:$0xff]
    %v70 = vld [vmem:[%s4] sm:$0x1]
    %v71 = vld [vmem:[%s5] sm:$0x1]
    %vm72 = vcmask 523264
    %v73 = vsel %vm72, %v64, 0.0
    %74 = vadd.xlane.f32.xlu0 %v73
    %v75 = vpop.xlane.xlu0 %74
    %v76 = vsel %vm72, %v65, 0.0
    %77 = vadd.xlane.f32.xlu0 %v76
    %v78 = vpop.xlane.xlu0 %77
    %v79 = vrcp.pop 64.0
    %v80 = vmul.f32 64.0, %v79
    %v81 = vsub.f32 1.0, %v80
    %v82 = vmul.f32 %v79, %v81
    %v83 = vadd.f32 %v79, %v82
    %vm84 = vweird.f32 %v79
    %v85 = vsel %vm84, %v79, %v83
    %v86 = vmul.f32 %v75, %v85
    %v87 = vmul.f32 %v78, %v85
    %v88 = vsub.f32 %v64, %v86
    %v89 = vsub.f32 %v65, %v87
    %v90 = vmul.f32 %v88, %v88
    %v91 = vmul.f32 %v89, %v89
    %v92 = vsel %vm72, %v90, 0.0
    %93 = vadd.xlane.f32.xlu0 %v92
    %v94 = vpop.xlane.xlu0 %93
    %v95 = vsel %vm72, %v91, 0.0
    %96 = vadd.xlane.f32.xlu0 %v95
    %v97 = vpop.xlane.xlu0 %96
    %v98 = vmul.f32 %v94, %v85
    %v99 = vmul.f32 %v97, %v85
    %v100 = vadd.f32 %v98, 1e-05
    %v101 = vadd.f32 %v99, 1e-05
    %v102 = vrsqrt.pop %v100
    %v103 = vmul.f32 %v102, %v100
    %v104 = vmul.f32 %v103, %v102
    %v105 = vmul.f32 0.5, %v104
    %v106 = vsub.f32 1.5, %v105
    %v107 = vmul.f32 %v102, %v106
    %vm108 = vweird.f32 %v100
    %vm109 = vweird.f32 %v102
    %vm110 = vmor %vm108, %vm109
    %v111 = vsel %vm110, %v102, %v107
    %v112 = vrsqrt.pop %v101
    %v113 = vmul.f32 %v112, %v101
    %v114 = vmul.f32 %v113, %v112
    %v115 = vmul.f32 0.5, %v114
    %v116 = vsub.f32 1.5, %v115
    %v117 = vmul.f32 %v112, %v116
    %vm118 = vweird.f32 %v101
    %vm119 = vweird.f32 %v112
    %vm120 = vmor %vm118, %vm119
    %v121 = vsel %vm120, %v112, %v117
    %v122 = vmul.f32 %v88, %v111
    %v123 = vmul.f32 %v89, %v121
    %v125 = vperm.slane %v70, 0
    %v127 = vmul.f32 %v122, %v125
    %v128 = vmul.f32 %v123, %v125
    %v130 = vperm.slane %v71, 0
    %v132 = vadd.f32 %v127, %v130
    %v133 = vadd.f32 %v128, %v130
    %v134 = vpack.c.bf16 %v133, %v132
    %v135 = vld [vmem:[%s6] sm:$0xff]
    %v136 = vld [vmem:[%s6 + $0x8] sm:$0xff]
    %v137 = vld [vmem:[%s6 + $0x10] sm:$0xff]
    %v138 = vld [vmem:[%s6 + $0x18] sm:$0xff]
    %v139 = vld [vmem:[%s6 + $0x20] sm:$0xff]
    %v140 = vld [vmem:[%s6 + $0x28] sm:$0xff]
    %v141 = vld [vmem:[%s6 + $0x30] sm:$0xff]
    %v142 = vld [vmem:[%s6 + $0x38] sm:$0xff]
    %v143 = vld [vmem:[%s7] sm:$0x3]
    %v145 = vperm.slane %v143, 0
    %v146 = vperm.slane %v143, 1
    %v157 = vunpack.c.l.b16 %v135
    %v158 = vunpack.c.h.b16 %v135
    %v159 = vunpack.c.l.b16 %v136
    %v160 = vunpack.c.h.b16 %v136
    %v161 = vunpack.c.l.b16 %v137
    %v162 = vunpack.c.h.b16 %v137
    %v163 = vunpack.c.l.b16 %v138
    %v164 = vunpack.c.h.b16 %v138
    %v165 = vunpack.c.l.b16 %v139
    %v166 = vunpack.c.h.b16 %v139
    %v167 = vunpack.c.l.b16 %v140
    %v168 = vunpack.c.h.b16 %v140
    %v169 = vunpack.c.l.b16 %v141
    %v170 = vunpack.c.h.b16 %v141
    %v171 = vunpack.c.l.b16 %v142
    %v172 = vunpack.c.h.b16 %v142
    %v173 = vpack.c.b16 %v159, %v157
    %v174 = vpack.c.b16 %v160, %v158
    %v175 = vpack.c.b16 %v163, %v161
    %v176 = vpack.c.b16 %v164, %v162
    %v177 = vpack.c.b16 %v167, %v165
    %v178 = vpack.c.b16 %v168, %v166
    %v179 = vpack.c.b16 %v171, %v169
    %v180 = vpack.c.b16 %v172, %v170
    %v190 = vsel %vm72, %v134, 0
    %192 = vmatpush.bf16.msra.mxu0 0
    %193 = vmatpush.bf16.msra.mxu0 0
    %194 = vmatpush.bf16.msra.mxu0 0
    %195 = vmatpush.bf16.msra.mxu0 0
    %196 = vmatpush.bf16.msra.mxu0 %v179
    %197 = vmatpush.bf16.msra.mxu0 %v177
    %198 = vmatpush.bf16.msra.mxu0 %v175
    %199 = vmatpush.bf16.msra.mxu0 %v173
    %200 = vmatmul.bf16.gmra.mxu0 %v190
    %v201 = vpop.f32.mrf.mxu0
    %v202 = vadd.f32 %v145, %v201
    %v203 = vpop.f32.mrf.mxu0
    %v204 = vadd.f32 %v145, %v203
    %205 = vdwg.mxu0
    %206 = vmatpush.bf16.msra.mxu0 0
    %207 = vmatpush.bf16.msra.mxu0 0
    %208 = vmatpush.bf16.msra.mxu0 0
    %209 = vmatpush.bf16.msra.mxu0 0
    %210 = vmatpush.bf16.msra.mxu0 %v180
    %211 = vmatpush.bf16.msra.mxu0 %v178
    %212 = vmatpush.bf16.msra.mxu0 %v176
    %213 = vmatpush.bf16.msra.mxu0 %v174
    %214 = vmatmul.bf16.gmra.mxu0 %v190
    %v215 = vpop.f32.mrf.mxu0
    %v216 = vadd.f32 %v146, %v215
    %v217 = vpop.f32.mrf.mxu0
    %v218 = vadd.f32 %v146, %v217
    %219 = vdwg.mxu0
    %221 = vrot.lane.b32.xlu0 %v202, 96
    %v222 = vpop.permute.xlu0 %221
    %225 = vrot.lane.b32.xlu0 %v204, 96
    %v226 = vpop.permute.xlu0 %225
    %229 = vrot.lane.b32.xlu0 %v216, 96
    %v230 = vpop.permute.xlu0 %229
    %233 = vrot.lane.b32.xlu0 %v218, 96
    %v234 = vpop.permute.xlu0 %233
    %v236 = vpack.c.bf16 %v202, %v202
    %v237 = vpack.c.bf16 %v222, %v222
    %v238 = vpack.c.bf16 %v204, %v204
    %v239 = vpack.c.bf16 %v226, %v226
    %v241 = vunpack.c.l.b16 %v236
    %v242 = vpack.c.b16 %v241, %v241
    %243 = vrot.lane.b32.xlu0 %v242, 64
    %v244 = vpop.permute.xlu0 %243
    %vm245 = vcmask 261120
    %v247 = vsel %vm245, %v236, 0
    %v250 = vsel %vm245, %v244, 0
    %252 = vmatpush.bf16.xpose.msra.mxu0 0
    %253 = vmatpush.bf16.xpose.msra.mxu0 0
    %254 = vmatpush.bf16.xpose.msra.mxu0 0
    %255 = vmatpush.bf16.xpose.msra.mxu0 0
    %256 = vmatpush.bf16.xpose.msra.mxu0 0
    %257 = vmatpush.bf16.xpose.msra.mxu0 0
    %258 = vmatpush.bf16.xpose.msra.mxu0 0
    %259 = vmatpush.bf16.xpose.msra.mxu0 %v250
    %260 = vmatmul.bf16.gmra.mxu0 %v247
    %v261 = vpop.f32.mrf.mxu0
    %v262 = vadd.f32 0.0, %v261
    %v263 = vpop.f32.mrf.mxu0
    %264 = vdwg.mxu0
    %v266 = vunpack.c.l.b16 %v237
    %v267 = vpack.c.b16 %v266, %v266
    %268 = vrot.lane.b32.xlu0 %v267, 64
    %v269 = vpop.permute.xlu0 %268
    %v271 = vsel %vm245, %v237, 0
    %v274 = vsel %vm245, %v269, 0
    %276 = vmatpush.bf16.xpose.msra.mxu0 0
    %277 = vmatpush.bf16.xpose.msra.mxu0 0
    %278 = vmatpush.bf16.xpose.msra.mxu0 0
    %279 = vmatpush.bf16.xpose.msra.mxu0 0
    %280 = vmatpush.bf16.xpose.msra.mxu0 0
    %281 = vmatpush.bf16.xpose.msra.mxu0 0
    %282 = vmatpush.bf16.xpose.msra.mxu0 0
    %283 = vmatpush.bf16.xpose.msra.mxu0 %v274
    %284 = vmatmul.bf16.gmra.mxu0 %v271
    %v285 = vpop.f32.mrf.mxu0
    %v286 = vadd.f32 0.0, %v285
    %v287 = vpop.f32.mrf.mxu0
    %288 = vdwg.mxu0
    %v290 = vunpack.c.l.b16 %v238
    %v291 = vpack.c.b16 %v290, %v290
    %292 = vrot.lane.b32.xlu0 %v291, 64
    %v293 = vpop.permute.xlu0 %292
    %v295 = vsel %vm245, %v238, 0
    %v298 = vsel %vm245, %v293, 0
    %300 = vmatpush.bf16.xpose.msra.mxu0 0
    %301 = vmatpush.bf16.xpose.msra.mxu0 0
    %302 = vmatpush.bf16.xpose.msra.mxu0 0
    %303 = vmatpush.bf16.xpose.msra.mxu0 0
    %304 = vmatpush.bf16.xpose.msra.mxu0 0
    %305 = vmatpush.bf16.xpose.msra.mxu0 0
    %306 = vmatpush.bf16.xpose.msra.mxu0 0
    %307 = vmatpush.bf16.xpose.msra.mxu0 %v298
    %308 = vmatmul.bf16.gmra.mxu0 %v295
    %v309 = vpop.f32.mrf.mxu0
    %v310 = vadd.f32 0.0, %v309
    %v311 = vpop.f32.mrf.mxu0
    %312 = vdwg.mxu0
    %v314 = vunpack.c.l.b16 %v239
    %v315 = vpack.c.b16 %v314, %v314
    %316 = vrot.lane.b32.xlu0 %v315, 64
    %v317 = vpop.permute.xlu0 %316
    %v319 = vsel %vm245, %v239, 0
    %v322 = vsel %vm245, %v317, 0
    %324 = vmatpush.bf16.xpose.msra.mxu0 0
    %325 = vmatpush.bf16.xpose.msra.mxu0 0
    %326 = vmatpush.bf16.xpose.msra.mxu0 0
    %327 = vmatpush.bf16.xpose.msra.mxu0 0
    %328 = vmatpush.bf16.xpose.msra.mxu0 0
    %329 = vmatpush.bf16.xpose.msra.mxu0 0
    %330 = vmatpush.bf16.xpose.msra.mxu0 0
    %331 = vmatpush.bf16.xpose.msra.mxu0 %v322
    %332 = vmatmul.bf16.gmra.mxu0 %v319
    %v333 = vpop.f32.mrf.mxu0
    %v334 = vadd.f32 0.0, %v333
    %v335 = vpop.f32.mrf.mxu0
    %336 = vdwg.mxu0
    %v337 = vmul.f32 %v262, 0.17677669
    %v338 = vmul.f32 %v286, 0.17677669
    %v339 = vmul.f32 %v310, 0.17677669
    %v340 = vmul.f32 %v334, 0.17677669
    %v341 = vadd.f32 %v337, %v66
    %v342 = vadd.f32 %v338, %v67
    %v343 = vadd.f32 %v339, %v68
    %v344 = vadd.f32 %v340, %v69
    %vm345 = vcmask 64512
    %v346 = vsel %vm345, %v341, -inf
    %347 = vmax.xlane.f32.xlu0 %v346
    %v348 = vpop.xlane.xlu0 %347
    %v349 = vsel %vm345, %v342, -inf
    %350 = vmax.xlane.f32.xlu0 %v349
    %v351 = vpop.xlane.xlu0 %350
    %v352 = vsel %vm345, %v343, -inf
    %353 = vmax.xlane.f32.xlu0 %v352
    %v354 = vpop.xlane.xlu0 %353
    %v355 = vsel %vm345, %v344, -inf
    %356 = vmax.xlane.f32.xlu0 %v355
    %v357 = vpop.xlane.xlu0 %356
    %v358 = vsub.f32 %v341, %v348
    %v359 = vsub.f32 %v342, %v351
    %v360 = vsub.f32 %v343, %v354
    %v361 = vsub.f32 %v344, %v357
    %v362 = vmul.f32 %v358, 1.442695
    %v363 = vpow.pop %v362
    %v364 = vmul.f32 %v359, 1.442695
    %v365 = vpow.pop %v364
    %v366 = vmul.f32 %v360, 1.442695
    %v367 = vpow.pop %v366
    %v368 = vmul.f32 %v361, 1.442695
    %v369 = vpow.pop %v368
    %v370 = vsel %vm345, %v363, 0.0
    %371 = vadd.xlane.f32.xlu0 %v370
    %v372 = vpop.xlane.xlu0 %371
    %v373 = vsel %vm345, %v365, 0.0
    %374 = vadd.xlane.f32.xlu0 %v373
    %v375 = vpop.xlane.xlu0 %374
    %v376 = vsel %vm345, %v367, 0.0
    %377 = vadd.xlane.f32.xlu0 %v376
    %v378 = vpop.xlane.xlu0 %377
    %v379 = vsel %vm345, %v369, 0.0
    %380 = vadd.xlane.f32.xlu0 %v379
    %v381 = vpop.xlane.xlu0 %380
    %v382 = vrcp.pop %v372
    %v383 = vrcp.pop %v375
    %v384 = vrcp.pop %v378
    %v385 = vrcp.pop %v381
    %v386 = vmul.f32 %v363, %v382
    %v387 = vmul.f32 %v365, %v383
    %v388 = vmul.f32 %v367, %v384
    %v389 = vmul.f32 %v369, %v385
    %v390 = vpack.c.bf16 %v386, %v386
    %v391 = vpack.c.bf16 %v387, %v387
    %v392 = vpack.c.bf16 %v388, %v388
    %v393 = vpack.c.bf16 %v389, %v389
    %v394 = vpack.c.bf16 %v216, %v216
    %v395 = vpack.c.bf16 %v230, %v230
    %v396 = vpack.c.bf16 %v218, %v218
    %v397 = vpack.c.bf16 %v234, %v234
    %v399 = vsel %vm345, %v390, 0
    %vm401 = vcmask 1043456
    %v403 = vsel %vm401, %v394, 0
    %405 = vmatpush.bf16.msra.mxu0 0
    %406 = vmatpush.bf16.msra.mxu0 0
    %407 = vmatpush.bf16.msra.mxu0 0
    %408 = vmatpush.bf16.msra.mxu0 0
    %409 = vmatpush.bf16.msra.mxu0 0
    %410 = vmatpush.bf16.msra.mxu0 0
    %411 = vmatpush.bf16.msra.mxu0 0
    %412 = vmatpush.bf16.msra.mxu0 %v403
    %413 = vmatmul.bf16.gmra.mxu0 %v399
    %v414 = vpop.f32.mrf.mxu0
    %v415 = vadd.f32 0.0, %v414
    %v416 = vpop.f32.mrf.mxu0
    %417 = vdwg.mxu0
    %v419 = vsel %vm345, %v391, 0
    %v422 = vsel %vm401, %v395, 0
    %424 = vmatpush.bf16.msra.mxu0 0
    %425 = vmatpush.bf16.msra.mxu0 0
    %426 = vmatpush.bf16.msra.mxu0 0
    %427 = vmatpush.bf16.msra.mxu0 0
    %428 = vmatpush.bf16.msra.mxu0 0
    %429 = vmatpush.bf16.msra.mxu0 0
    %430 = vmatpush.bf16.msra.mxu0 0
    %431 = vmatpush.bf16.msra.mxu0 %v422
    %432 = vmatmul.bf16.gmra.mxu0 %v419
    %v433 = vpop.f32.mrf.mxu0
    %v434 = vadd.f32 0.0, %v433
    %v435 = vpop.f32.mrf.mxu0
    %436 = vdwg.mxu0
    %v438 = vsel %vm345, %v392, 0
    %v441 = vsel %vm401, %v396, 0
    %443 = vmatpush.bf16.msra.mxu0 0
    %444 = vmatpush.bf16.msra.mxu0 0
    %445 = vmatpush.bf16.msra.mxu0 0
    %446 = vmatpush.bf16.msra.mxu0 0
    %447 = vmatpush.bf16.msra.mxu0 0
    %448 = vmatpush.bf16.msra.mxu0 0
    %449 = vmatpush.bf16.msra.mxu0 0
    %450 = vmatpush.bf16.msra.mxu0 %v441
    %451 = vmatmul.bf16.gmra.mxu0 %v438
    %v452 = vpop.f32.mrf.mxu0
    %v453 = vadd.f32 0.0, %v452
    %v454 = vpop.f32.mrf.mxu0
    %455 = vdwg.mxu0
    %v457 = vsel %vm345, %v393, 0
    %v460 = vsel %vm401, %v397, 0
    %462 = vmatpush.bf16.msra.mxu0 0
    %463 = vmatpush.bf16.msra.mxu0 0
    %464 = vmatpush.bf16.msra.mxu0 0
    %465 = vmatpush.bf16.msra.mxu0 0
    %466 = vmatpush.bf16.msra.mxu0 0
    %467 = vmatpush.bf16.msra.mxu0 0
    %468 = vmatpush.bf16.msra.mxu0 0
    %469 = vmatpush.bf16.msra.mxu0 %v460
    %470 = vmatmul.bf16.gmra.mxu0 %v457
    %v471 = vpop.f32.mrf.mxu0
    %v472 = vadd.f32 0.0, %v471
    %v473 = vpop.f32.mrf.mxu0
    %474 = vdwg.mxu0
    %v475 = vpack.c.bf16 %v415, %v415
    %v476 = vpack.c.bf16 %v434, %v434
    %v477 = vpack.c.bf16 %v453, %v453
    %v478 = vpack.c.bf16 %v472, %v472
    %v479 = vld [vmem:[%s8] sm:$0xf]
    %v480 = vld [vmem:[%s8 + $0x4] sm:$0xf]
    %v481 = vld [vmem:[%s8 + $0x8] sm:$0xf]
    %v482 = vld [vmem:[%s8 + $0xc] sm:$0xf]
    %v483 = vld [vmem:[%s8 + $0x10] sm:$0xf]
    %v484 = vld [vmem:[%s8 + $0x14] sm:$0xf]
    %v485 = vld [vmem:[%s8 + $0x18] sm:$0xf]
    %v486 = vld [vmem:[%s8 + $0x1c] sm:$0xf]
    %v487 = vld [vmem:[%s8 + $0x20] sm:$0xf]
    %v488 = vld [vmem:[%s8 + $0x24] sm:$0xf]
    %v489 = vld [vmem:[%s8 + $0x28] sm:$0xf]
    %v490 = vld [vmem:[%s8 + $0x2c] sm:$0xf]
    %v491 = vld [vmem:[%s8 + $0x30] sm:$0xf]
    %v492 = vld [vmem:[%s8 + $0x34] sm:$0xf]
    %v493 = vld [vmem:[%s8 + $0x38] sm:$0xf]
    %v494 = vld [vmem:[%s8 + $0x3c] sm:$0xf]
    %v499 = vunpack.c.l.b16 %v479
    %v500 = vunpack.c.l.b16 %v480
    %v501 = vunpack.c.l.b16 %v481
    %v502 = vunpack.c.l.b16 %v482
    %v503 = vpack.c.b16 %v500, %v499
    %v504 = vpack.c.b16 %v502, %v501
    %v508 = vsel %vm245, %v475, 0
    %510 = vmatpush.bf16.msra.mxu0 0
    %511 = vmatpush.bf16.msra.mxu0 0
    %512 = vmatpush.bf16.msra.mxu0 0
    %513 = vmatpush.bf16.msra.mxu0 0
    %514 = vmatpush.bf16.msra.mxu0 0
    %515 = vmatpush.bf16.msra.mxu0 0
    %516 = vmatpush.bf16.msra.mxu0 %v504
    %517 = vmatpush.bf16.msra.mxu0 %v503
    %518 = vmatmul.bf16.gmra.mxu0 %v508
    %v519 = vpop.f32.mrf.mxu0
    %v520 = vadd.f32 0.0, %v519
    %v521 = vpop.f32.mrf.mxu0
    %522 = vdwg.mxu0
    %v527 = vunpack.c.l.b16 %v483
    %v528 = vunpack.c.l.b16 %v484
    %v529 = vunpack.c.l.b16 %v485
    %v530 = vunpack.c.l.b16 %v486
    %v531 = vpack.c.b16 %v528, %v527
    %v532 = vpack.c.b16 %v530, %v529
    %v536 = vsel %vm245, %v476, 0
    %538 = vmatpush.bf16.msra.mxu0 0
    %539 = vmatpush.bf16.msra.mxu0 0
    %540 = vmatpush.bf16.msra.mxu0 0
    %541 = vmatpush.bf16.msra.mxu0 0
    %542 = vmatpush.bf16.msra.mxu0 0
    %543 = vmatpush.bf16.msra.mxu0 0
    %544 = vmatpush.bf16.msra.mxu0 %v532
    %545 = vmatpush.bf16.msra.mxu0 %v531
    %546 = vmatmul.bf16.gmra.mxu0 %v536
    %v547 = vpop.f32.mrf.mxu0
    %v548 = vadd.f32 0.0, %v547
    %v549 = vpop.f32.mrf.mxu0
    %550 = vdwg.mxu0
    %v555 = vunpack.c.l.b16 %v487
    %v556 = vunpack.c.l.b16 %v488
    %v557 = vunpack.c.l.b16 %v489
    %v558 = vunpack.c.l.b16 %v490
    %v559 = vpack.c.b16 %v556, %v555
    %v560 = vpack.c.b16 %v558, %v557
    %v564 = vsel %vm245, %v477, 0
    %566 = vmatpush.bf16.msra.mxu0 0
    %567 = vmatpush.bf16.msra.mxu0 0
    %568 = vmatpush.bf16.msra.mxu0 0
    %569 = vmatpush.bf16.msra.mxu0 0
    %570 = vmatpush.bf16.msra.mxu0 0
    %571 = vmatpush.bf16.msra.mxu0 0
    %572 = vmatpush.bf16.msra.mxu0 %v560
    %573 = vmatpush.bf16.msra.mxu0 %v559
    %574 = vmatmul.bf16.gmra.mxu0 %v564
    %v575 = vpop.f32.mrf.mxu0
    %v576 = vadd.f32 0.0, %v575
    %v577 = vpop.f32.mrf.mxu0
    %578 = vdwg.mxu0
    %v583 = vunpack.c.l.b16 %v491
    %v584 = vunpack.c.l.b16 %v492
    %v585 = vunpack.c.l.b16 %v493
    %v586 = vunpack.c.l.b16 %v494
    %v587 = vpack.c.b16 %v584, %v583
    %v588 = vpack.c.b16 %v586, %v585
    %v592 = vsel %vm245, %v478, 0
    %594 = vmatpush.bf16.msra.mxu0 0
    %595 = vmatpush.bf16.msra.mxu0 0
    %596 = vmatpush.bf16.msra.mxu0 0
    %597 = vmatpush.bf16.msra.mxu0 0
    %598 = vmatpush.bf16.msra.mxu0 0
    %599 = vmatpush.bf16.msra.mxu0 0
    %600 = vmatpush.bf16.msra.mxu0 %v588
    %601 = vmatpush.bf16.msra.mxu0 %v587
    %602 = vmatmul.bf16.gmra.mxu0 %v592
    %v603 = vpop.f32.mrf.mxu0
    %v604 = vadd.f32 0.0, %v603
    %v605 = vpop.f32.mrf.mxu0
    %606 = vdwg.mxu0
    %v607 = vadd.f32 %v520, %v548
    %v608 = vadd.f32 %v576, %v604
    %v609 = vadd.f32 %v64, %v607
    %v610 = vadd.f32 %v65, %v608
    %v611 = vld [vmem:[%s9] sm:$0x1]
    %v613 = vperm.slane %v611, 0
    %v615 = vadd.f32 %v609, %v613
    %v616 = vadd.f32 %v610, %v613
    %v617 = vld [vmem:[%s10] sm:$0x1]
    %v618 = vld [vmem:[%s11] sm:$0x1]
    %v619 = vsel %vm72, %v615, 0.0
    %620 = vadd.xlane.f32.xlu0 %v619
    %v621 = vpop.xlane.xlu0 %620
    %v622 = vsel %vm72, %v616, 0.0
    %623 = vadd.xlane.f32.xlu0 %v622
    %v624 = vpop.xlane.xlu0 %623
    %v625 = vmul.f32 %v621, %v85
    %v626 = vmul.f32 %v624, %v85
    %v627 = vsub.f32 %v615, %v625
    %v628 = vsub.f32 %v616, %v626
    %v629 = vmul.f32 %v627, %v627
    %v630 = vmul.f32 %v628, %v628
    %v631 = vsel %vm72, %v629, 0.0
    %632 = vadd.xlane.f32.xlu0 %v631
    %v633 = vpop.xlane.xlu0 %632
    %v634 = vsel %vm72, %v630, 0.0
    %635 = vadd.xlane.f32.xlu0 %v634
    %v636 = vpop.xlane.xlu0 %635
    %v637 = vmul.f32 %v633, %v85
    %v638 = vmul.f32 %v636, %v85
    %v639 = vadd.f32 %v637, 1e-05
    %v640 = vadd.f32 %v638, 1e-05
    %v641 = vrsqrt.pop %v639
    %v642 = vmul.f32 %v641, %v639
    %v643 = vmul.f32 %v642, %v641
    %v644 = vmul.f32 0.5, %v643
    %v645 = vsub.f32 1.5, %v644
    %v646 = vmul.f32 %v641, %v645
    %vm647 = vweird.f32 %v639
    %vm648 = vweird.f32 %v641
    %vm649 = vmor %vm647, %vm648
    %v650 = vsel %vm649, %v641, %v646
    %v651 = vrsqrt.pop %v640
    %v652 = vmul.f32 %v651, %v640
    %v653 = vmul.f32 %v652, %v651
    %v654 = vmul.f32 0.5, %v653
    %v655 = vsub.f32 1.5, %v654
    %v656 = vmul.f32 %v651, %v655
    %vm657 = vweird.f32 %v640
    %vm658 = vweird.f32 %v651
    %vm659 = vmor %vm657, %vm658
    %v660 = vsel %vm659, %v651, %v656
    %v661 = vmul.f32 %v627, %v650
    %v662 = vmul.f32 %v628, %v660
    %v664 = vperm.slane %v617, 0
    %v666 = vmul.f32 %v661, %v664
    %v667 = vmul.f32 %v662, %v664
    %v669 = vperm.slane %v618, 0
    %v671 = vadd.f32 %v666, %v669
    %v672 = vadd.f32 %v667, %v669
    %v673 = vpack.c.bf16 %v672, %v671
    %v674 = vld [vmem:[%s12] sm:$0xff]
    %v675 = vld [vmem:[%s12 + $0x8] sm:$0xff]
    %v676 = vld [vmem:[%s12 + $0x10] sm:$0xff]
    %v677 = vld [vmem:[%s12 + $0x18] sm:$0xff]
    %v678 = vld [vmem:[%s12 + $0x20] sm:$0xff]
    %v679 = vld [vmem:[%s12 + $0x28] sm:$0xff]
    %v680 = vld [vmem:[%s12 + $0x30] sm:$0xff]
    %v681 = vld [vmem:[%s12 + $0x38] sm:$0xff]
    %v682 = vld [vmem:[%s13] sm:$0x3]
    %v684 = vperm.slane %v682, 0
    %v685 = vperm.slane %v682, 1
    %v696 = vunpack.c.l.b16 %v674
    %v697 = vunpack.c.h.b16 %v674
    %v698 = vunpack.c.l.b16 %v675
    %v699 = vunpack.c.h.b16 %v675
    %v700 = vunpack.c.l.b16 %v676
    %v701 = vunpack.c.h.b16 %v676
    %v702 = vunpack.c.l.b16 %v677
    %v703 = vunpack.c.h.b16 %v677
    %v704 = vunpack.c.l.b16 %v678
    %v705 = vunpack.c.h.b16 %v678
    %v706 = vunpack.c.l.b16 %v679
    %v707 = vunpack.c.h.b16 %v679
    %v708 = vunpack.c.l.b16 %v680
    %v709 = vunpack.c.h.b16 %v680
    %v710 = vunpack.c.l.b16 %v681
    %v711 = vunpack.c.h.b16 %v681
    %v712 = vpack.c.b16 %v698, %v696
    %v713 = vpack.c.b16 %v699, %v697
    %v714 = vpack.c.b16 %v702, %v700
    %v715 = vpack.c.b16 %v703, %v701
    %v716 = vpack.c.b16 %v706, %v704
    %v717 = vpack.c.b16 %v707, %v705
    %v718 = vpack.c.b16 %v710, %v708
    %v719 = vpack.c.b16 %v711, %v709
    %v729 = vsel %vm72, %v673, 0
    %731 = vmatpush.bf16.msra.mxu0 0
    %732 = vmatpush.bf16.msra.mxu0 0
    %733 = vmatpush.bf16.msra.mxu0 0
    %734 = vmatpush.bf16.msra.mxu0 0
    %735 = vmatpush.bf16.msra.mxu0 %v718
    %736 = vmatpush.bf16.msra.mxu0 %v716
    %737 = vmatpush.bf16.msra.mxu0 %v714
    %738 = vmatpush.bf16.msra.mxu0 %v712
    %739 = vmatmul.bf16.gmra.mxu0 %v729
    %v740 = vpop.f32.mrf.mxu0
    %v741 = vadd.f32 %v684, %v740
    %v742 = vpop.f32.mrf.mxu0
    %v743 = vadd.f32 %v684, %v742
    %744 = vdwg.mxu0
    %745 = vmatpush.bf16.msra.mxu0 0
    %746 = vmatpush.bf16.msra.mxu0 0
    %747 = vmatpush.bf16.msra.mxu0 0
    %748 = vmatpush.bf16.msra.mxu0 0
    %749 = vmatpush.bf16.msra.mxu0 %v719
    %750 = vmatpush.bf16.msra.mxu0 %v717
    %751 = vmatpush.bf16.msra.mxu0 %v715
    %752 = vmatpush.bf16.msra.mxu0 %v713
    %753 = vmatmul.bf16.gmra.mxu0 %v729
    %v754 = vpop.f32.mrf.mxu0
    %v755 = vadd.f32 %v685, %v754
    %v756 = vpop.f32.mrf.mxu0
    %v757 = vadd.f32 %v685, %v756
    %758 = vdwg.mxu0
    %v759 = vmul.f32 %v741, 0.5
    %v760 = vmul.f32 %v755, 0.5
    %v761 = vmul.f32 %v743, 0.5
    %v762 = vmul.f32 %v757, 0.5
    %v763 = vmul.f32 %v741, 0.044715
    %v764 = vmul.f32 %v755, 0.044715
    %v765 = vmul.f32 %v743, 0.044715
    %v766 = vmul.f32 %v757, 0.044715
    %v767 = vmul.f32 %v763, %v741
    %v768 = vmul.f32 %v764, %v755
    %v769 = vmul.f32 %v765, %v743
    %v770 = vmul.f32 %v766, %v757
    %v771 = vmul.f32 %v767, %v741
    %v772 = vmul.f32 %v768, %v755
    %v773 = vmul.f32 %v769, %v743
    %v774 = vmul.f32 %v770, %v757
    %v775 = vadd.f32 %v741, %v771
    %v776 = vadd.f32 %v755, %v772
    %v777 = vadd.f32 %v743, %v773
    %v778 = vadd.f32 %v757, %v774
    %v779 = vmul.f32 %v775, 0.7978846
    %v780 = vmul.f32 %v776, 0.7978846
    %v781 = vmul.f32 %v777, 0.7978846
    %v782 = vmul.f32 %v778, 0.7978846
    %v783 = vtanh.pop %v779
    %v784 = vtanh.pop %v780
    %v785 = vtanh.pop %v781
    %v786 = vtanh.pop %v782
    %v787 = vadd.f32 %v783, 1.0
    %v788 = vadd.f32 %v784, 1.0
    %v789 = vadd.f32 %v785, 1.0
    %v790 = vadd.f32 %v786, 1.0
    %v791 = vmul.f32 %v759, %v787
    %v792 = vmul.f32 %v760, %v788
    %v793 = vmul.f32 %v761, %v789
    %v794 = vmul.f32 %v762, %v790
    %v795 = vpack.c.bf16 %v793, %v791
    %v796 = vpack.c.bf16 %v794, %v792
    %v797 = vld [vmem:[%s14] sm:$0xf]
    %v798 = vld [vmem:[%s14 + $0x4] sm:$0xf]
    %v799 = vld [vmem:[%s14 + $0x8] sm:$0xf]
    %v800 = vld [vmem:[%s14 + $0xc] sm:$0xf]
    %v801 = vld [vmem:[%s14 + $0x10] sm:$0xf]
    %v802 = vld [vmem:[%s14 + $0x14] sm:$0xf]
    %v803 = vld [vmem:[%s14 + $0x18] sm:$0xf]
    %v804 = vld [vmem:[%s14 + $0x1c] sm:$0xf]
    %v805 = vld [vmem:[%s14 + $0x20] sm:$0xf]
    %v806 = vld [vmem:[%s14 + $0x24] sm:$0xf]
    %v807 = vld [vmem:[%s14 + $0x28] sm:$0xf]
    %v808 = vld [vmem:[%s14 + $0x2c] sm:$0xf]
    %v809 = vld [vmem:[%s14 + $0x30] sm:$0xf]
    %v810 = vld [vmem:[%s14 + $0x34] sm:$0xf]
    %v811 = vld [vmem:[%s14 + $0x38] sm:$0xf]
    %v812 = vld [vmem:[%s14 + $0x3c] sm:$0xf]
    %v813 = vld [vmem:[%s14 + $0x40] sm:$0xf]
    %v814 = vld [vmem:[%s14 + $0x44] sm:$0xf]
    %v815 = vld [vmem:[%s14 + $0x48] sm:$0xf]
    %v816 = vld [vmem:[%s14 + $0x4c] sm:$0xf]
    %v817 = vld [vmem:[%s14 + $0x50] sm:$0xf]
    %v818 = vld [vmem:[%s14 + $0x54] sm:$0xf]
    %v819 = vld [vmem:[%s14 + $0x58] sm:$0xf]
    %v820 = vld [vmem:[%s14 + $0x5c] sm:$0xf]
    %v821 = vld [vmem:[%s14 + $0x60] sm:$0xf]
    %v822 = vld [vmem:[%s14 + $0x64] sm:$0xf]
    %v823 = vld [vmem:[%s14 + $0x68] sm:$0xf]
    %v824 = vld [vmem:[%s14 + $0x6c] sm:$0xf]
    %v825 = vld [vmem:[%s14 + $0x70] sm:$0xf]
    %v826 = vld [vmem:[%s14 + $0x74] sm:$0xf]
    %v827 = vld [vmem:[%s14 + $0x78] sm:$0xf]
    %v828 = vld [vmem:[%s14 + $0x7c] sm:$0xf]
    %v861 = vunpack.c.l.b16 %v797
    %v862 = vunpack.c.l.b16 %v798
    %v863 = vunpack.c.l.b16 %v799
    %v864 = vunpack.c.l.b16 %v800
    %v865 = vunpack.c.l.b16 %v801
    %v866 = vunpack.c.l.b16 %v802
    %v867 = vunpack.c.l.b16 %v803
    %v868 = vunpack.c.l.b16 %v804
    %v869 = vunpack.c.l.b16 %v805
    %v870 = vunpack.c.l.b16 %v806
    %v871 = vunpack.c.l.b16 %v807
    %v872 = vunpack.c.l.b16 %v808
    %v873 = vunpack.c.l.b16 %v809
    %v874 = vunpack.c.l.b16 %v810
    %v875 = vunpack.c.l.b16 %v811
    %v876 = vunpack.c.l.b16 %v812
    %v877 = vunpack.c.l.b16 %v813
    %v878 = vunpack.c.l.b16 %v814
    %v879 = vunpack.c.l.b16 %v815
    %v880 = vunpack.c.l.b16 %v816
    %v881 = vunpack.c.l.b16 %v817
    %v882 = vunpack.c.l.b16 %v818
    %v883 = vunpack.c.l.b16 %v819
    %v884 = vunpack.c.l.b16 %v820
    %v885 = vunpack.c.l.b16 %v821
    %v886 = vunpack.c.l.b16 %v822
    %v887 = vunpack.c.l.b16 %v823
    %v888 = vunpack.c.l.b16 %v824
    %v889 = vunpack.c.l.b16 %v825
    %v890 = vunpack.c.l.b16 %v826
    %v891 = vunpack.c.l.b16 %v827
    %v892 = vunpack.c.l.b16 %v828
    %v893 = vpack.c.b16 %v862, %v861
    %v894 = vpack.c.b16 %v864, %v863
    %v895 = vpack.c.b16 %v866, %v865
    %v896 = vpack.c.b16 %v868, %v867
    %v897 = vpack.c.b16 %v870, %v869
    %v898 = vpack.c.b16 %v872, %v871
    %v899 = vpack.c.b16 %v874, %v873
    %v900 = vpack.c.b16 %v876, %v875
    %v901 = vpack.c.b16 %v878, %v877
    %v902 = vpack.c.b16 %v880, %v879
    %v903 = vpack.c.b16 %v882, %v881
    %v904 = vpack.c.b16 %v884, %v883
    %v905 = vpack.c.b16 %v886, %v885
    %v906 = vpack.c.b16 %v888, %v887
    %v907 = vpack.c.b16 %v890, %v889
    %v908 = vpack.c.b16 %v892, %v891
    %925 = vmatpush.bf16.msra.mxu0 %v900
    %926 = vmatpush.bf16.msra.mxu0 %v899
    %927 = vmatpush.bf16.msra.mxu0 %v898
    %928 = vmatpush.bf16.msra.mxu0 %v897
    %929 = vmatpush.bf16.msra.mxu0 %v896
    %930 = vmatpush.bf16.msra.mxu0 %v895
    %931 = vmatpush.bf16.msra.mxu0 %v894
    %932 = vmatpush.bf16.msra.mxu0 %v893
    %933 = vmatmul.bf16.gmra.mxu0 %v795
    %v934 = vpop.f32.mrf.mxu0
    %v935 = vadd.f32 0.0, %v934
    %v936 = vpop.f32.mrf.mxu0
    %v937 = vadd.f32 0.0, %v936
    %938 = vdwg.mxu0
    %939 = vmatpush.bf16.msra.mxu0 %v908
    %940 = vmatpush.bf16.msra.mxu0 %v907
    %941 = vmatpush.bf16.msra.mxu0 %v906
    %942 = vmatpush.bf16.msra.mxu0 %v905
    %943 = vmatpush.bf16.msra.mxu0 %v904
    %944 = vmatpush.bf16.msra.mxu0 %v903
    %945 = vmatpush.bf16.msra.mxu0 %v902
    %946 = vmatpush.bf16.msra.mxu0 %v901
    %947 = vmatmul.bf16.gmra.mxu0 %v796
    %v948 = vpop.f32.mrf.mxu0
    %v949 = vadd.f32 %v935, %v948
    %v950 = vpop.f32.mrf.mxu0
    %v951 = vadd.f32 %v937, %v950
    %952 = vdwg.mxu0
    %v953 = vadd.f32 %v615, %v949
    %v954 = vadd.f32 %v616, %v951
    %v955 = vld [vmem:[%s15] sm:$0x1]
    %v957 = vperm.slane %v955, 0
    %v959 = vadd.f32 %v953, %v957
    %v960 = vadd.f32 %v954, %v957
    %s961 = scalar_lea.vmem %s4, 1
    %v962 = vld [vmem:[%s961] sm:$0x1]
    %s963 = scalar_lea.vmem %s5, 1
    %v964 = vld [vmem:[%s963] sm:$0x1]
    %v965 = vsel %vm72, %v959, 0.0
    %966 = vadd.xlane.f32.xlu0 %v965
    %v967 = vpop.xlane.xlu0 %966
    %v968 = vsel %vm72, %v960, 0.0
    %969 = vadd.xlane.f32.xlu0 %v968
    %v970 = vpop.xlane.xlu0 %969
    %v971 = vmul.f32 %v967, %v85
    %v972 = vmul.f32 %v970, %v85
    %v973 = vsub.f32 %v959, %v971
    %v974 = vsub.f32 %v960, %v972
    %v975 = vmul.f32 %v973, %v973
    %v976 = vmul.f32 %v974, %v974
    %v977 = vsel %vm72, %v975, 0.0
    %978 = vadd.xlane.f32.xlu0 %v977
    %v979 = vpop.xlane.xlu0 %978
    %v980 = vsel %vm72, %v976, 0.0
    %981 = vadd.xlane.f32.xlu0 %v980
    %v982 = vpop.xlane.xlu0 %981
    %v983 = vmul.f32 %v979, %v85
    %v984 = vmul.f32 %v982, %v85
    %v985 = vadd.f32 %v983, 1e-05
    %v986 = vadd.f32 %v984, 1e-05
    %v987 = vrsqrt.pop %v985
    %v988 = vmul.f32 %v987, %v985
    %v989 = vmul.f32 %v988, %v987
    %v990 = vmul.f32 0.5, %v989
    %v991 = vsub.f32 1.5, %v990
    %v992 = vmul.f32 %v987, %v991
    %vm993 = vweird.f32 %v985
    %vm994 = vweird.f32 %v987
    %vm995 = vmor %vm993, %vm994
    %v996 = vsel %vm995, %v987, %v992
    %v997 = vrsqrt.pop %v986
    %v998 = vmul.f32 %v997, %v986
    %v999 = vmul.f32 %v998, %v997
    %v1000 = vmul.f32 0.5, %v999
    %v1001 = vsub.f32 1.5, %v1000
    %v1002 = vmul.f32 %v997, %v1001
    %vm1003 = vweird.f32 %v986
    %vm1004 = vweird.f32 %v997
    %vm1005 = vmor %vm1003, %vm1004
    %v1006 = vsel %vm1005, %v997, %v1002
    %v1007 = vmul.f32 %v973, %v996
    %v1008 = vmul.f32 %v974, %v1006
    %v1010 = vperm.slane %v962, 0
    %v1012 = vmul.f32 %v1007, %v1010
    %v1013 = vmul.f32 %v1008, %v1010
    %v1015 = vperm.slane %v964, 0
    %v1017 = vadd.f32 %v1012, %v1015
    %v1018 = vadd.f32 %v1013, %v1015
    %v1019 = vpack.c.bf16 %v1018, %v1017
    %s1020 = scalar_lea.vmem %s6, 64
    %v1021 = vld [vmem:[%s1020] sm:$0xff]
    %v1022 = vld [vmem:[%s1020 + $0x8] sm:$0xff]
    %v1023 = vld [vmem:[%s1020 + $0x10] sm:$0xff]
    %v1024 = vld [vmem:[%s1020 + $0x18] sm:$0xff]
    %v1025 = vld [vmem:[%s1020 + $0x20] sm:$0xff]
    %v1026 = vld [vmem:[%s1020 + $0x28] sm:$0xff]
    %v1027 = vld [vmem:[%s1020 + $0x30] sm:$0xff]
    %v1028 = vld [vmem:[%s1020 + $0x38] sm:$0xff]
    %s1029 = scalar_lea.vmem %s7, 2
    %v1030 = vld [vmem:[%s1029] sm:$0x3]
    %v1032 = vperm.slane %v1030, 0
    %v1033 = vperm.slane %v1030, 1
    %v1044 = vunpack.c.l.b16 %v1021
    %v1045 = vunpack.c.h.b16 %v1021
    %v1046 = vunpack.c.l.b16 %v1022
    %v1047 = vunpack.c.h.b16 %v1022
    %v1048 = vunpack.c.l.b16 %v1023
    %v1049 = vunpack.c.h.b16 %v1023
    %v1050 = vunpack.c.l.b16 %v1024
    %v1051 = vunpack.c.h.b16 %v1024
    %v1052 = vunpack.c.l.b16 %v1025
    %v1053 = vunpack.c.h.b16 %v1025
    %v1054 = vunpack.c.l.b16 %v1026
    %v1055 = vunpack.c.h.b16 %v1026
    %v1056 = vunpack.c.l.b16 %v1027
    %v1057 = vunpack.c.h.b16 %v1027
    %v1058 = vunpack.c.l.b16 %v1028
    %v1059 = vunpack.c.h.b16 %v1028
    %v1060 = vpack.c.b16 %v1046, %v1044
    %v1061 = vpack.c.b16 %v1047, %v1045
    %v1062 = vpack.c.b16 %v1050, %v1048
    %v1063 = vpack.c.b16 %v1051, %v1049
    %v1064 = vpack.c.b16 %v1054, %v1052
    %v1065 = vpack.c.b16 %v1055, %v1053
    %v1066 = vpack.c.b16 %v1058, %v1056
    %v1067 = vpack.c.b16 %v1059, %v1057
    %v1077 = vsel %vm72, %v1019, 0
    %1079 = vmatpush.bf16.msra.mxu0 0
    %1080 = vmatpush.bf16.msra.mxu0 0
    %1081 = vmatpush.bf16.msra.mxu0 0
    %1082 = vmatpush.bf16.msra.mxu0 0
    %1083 = vmatpush.bf16.msra.mxu0 %v1066
    %1084 = vmatpush.bf16.msra.mxu0 %v1064
    %1085 = vmatpush.bf16.msra.mxu0 %v1062
    %1086 = vmatpush.bf16.msra.mxu0 %v1060
    %1087 = vmatmul.bf16.gmra.mxu0 %v1077
    %v1088 = vpop.f32.mrf.mxu0
    %v1089 = vadd.f32 %v1032, %v1088
    %v1090 = vpop.f32.mrf.mxu0
    %v1091 = vadd.f32 %v1032, %v1090
    %1092 = vdwg.mxu0
    %1093 = vmatpush.bf16.msra.mxu0 0
    %1094 = vmatpush.bf16.msra.mxu0 0
    %1095 = vmatpush.bf16.msra.mxu0 0
    %1096 = vmatpush.bf16.msra.mxu0 0
    %1097 = vmatpush.bf16.msra.mxu0 %v1067
    %1098 = vmatpush.bf16.msra.mxu0 %v1065
    %1099 = vmatpush.bf16.msra.mxu0 %v1063
    %1100 = vmatpush.bf16.msra.mxu0 %v1061
    %1101 = vmatmul.bf16.gmra.mxu0 %v1077
    %v1102 = vpop.f32.mrf.mxu0
    %v1103 = vadd.f32 %v1033, %v1102
    %v1104 = vpop.f32.mrf.mxu0
    %v1105 = vadd.f32 %v1033, %v1104
    %1106 = vdwg.mxu0
    %1108 = vrot.lane.b32.xlu0 %v1089, 96
    %v1109 = vpop.permute.xlu0 %1108
    %1112 = vrot.lane.b32.xlu0 %v1091, 96
    %v1113 = vpop.permute.xlu0 %1112
    %1116 = vrot.lane.b32.xlu0 %v1103, 96
    %v1117 = vpop.permute.xlu0 %1116
    %1120 = vrot.lane.b32.xlu0 %v1105, 96
    %v1121 = vpop.permute.xlu0 %1120
    %v1123 = vpack.c.bf16 %v1089, %v1089
    %v1124 = vpack.c.bf16 %v1109, %v1109
    %v1125 = vpack.c.bf16 %v1091, %v1091
    %v1126 = vpack.c.bf16 %v1113, %v1113
    %v1128 = vunpack.c.l.b16 %v1123
    %v1129 = vpack.c.b16 %v1128, %v1128
    %1130 = vrot.lane.b32.xlu0 %v1129, 64
    %v1131 = vpop.permute.xlu0 %1130
    %v1133 = vsel %vm245, %v1123, 0
    %v1136 = vsel %vm245, %v1131, 0
    %1138 = vmatpush.bf16.xpose.msra.mxu0 0
    %1139 = vmatpush.bf16.xpose.msra.mxu0 0
    %1140 = vmatpush.bf16.xpose.msra.mxu0 0
    %1141 = vmatpush.bf16.xpose.msra.mxu0 0
    %1142 = vmatpush.bf16.xpose.msra.mxu0 0
    %1143 = vmatpush.bf16.xpose.msra.mxu0 0
    %1144 = vmatpush.bf16.xpose.msra.mxu0 0
    %1145 = vmatpush.bf16.xpose.msra.mxu0 %v1136
    %1146 = vmatmul.bf16.gmra.mxu0 %v1133
    %v1147 = vpop.f32.mrf.mxu0
    %v1148 = vadd.f32 0.0, %v1147
    %v1149 = vpop.f32.mrf.mxu0
    %1150 = vdwg.mxu0
    %v1152 = vunpack.c.l.b16 %v1124
    %v1153 = vpack.c.b16 %v1152, %v1152
    %1154 = vrot.lane.b32.xlu0 %v1153, 64
    %v1155 = vpop.permute.xlu0 %1154
    %v1157 = vsel %vm245, %v1124, 0
    %v1160 = vsel %vm245, %v1155, 0
    %1162 = vmatpush.bf16.xpose.msra.mxu0 0
    %1163 = vmatpush.bf16.xpose.msra.mxu0 0
    %1164 = vmatpush.bf16.xpose.msra.mxu0 0
    %1165 = vmatpush.bf16.xpose.msra.mxu0 0
    %1166 = vmatpush.bf16.xpose.msra.mxu0 0
    %1167 = vmatpush.bf16.xpose.msra.mxu0 0
    %1168 = vmatpush.bf16.xpose.msra.mxu0 0
    %1169 = vmatpush.bf16.xpose.msra.mxu0 %v1160
    %1170 = vmatmul.bf16.gmra.mxu0 %v1157
    %v1171 = vpop.f32.mrf.mxu0
    %v1172 = vadd.f32 0.0, %v1171
    %v1173 = vpop.f32.mrf.mxu0
    %1174 = vdwg.mxu0
    %v1176 = vunpack.c.l.b16 %v1125
    %v1177 = vpack.c.b16 %v1176, %v1176
    %1178 = vrot.lane.b32.xlu0 %v1177, 64
    %v1179 = vpop.permute.xlu0 %1178
    %v1181 = vsel %vm245, %v1125, 0
    %v1184 = vsel %vm245, %v1179, 0
    %1186 = vmatpush.bf16.xpose.msra.mxu0 0
    %1187 = vmatpush.bf16.xpose.msra.mxu0 0
    %1188 = vmatpush.bf16.xpose.msra.mxu0 0
    %1189 = vmatpush.bf16.xpose.msra.mxu0 0
    %1190 = vmatpush.bf16.xpose.msra.mxu0 0
    %1191 = vmatpush.bf16.xpose.msra.mxu0 0
    %1192 = vmatpush.bf16.xpose.msra.mxu0 0
    %1193 = vmatpush.bf16.xpose.msra.mxu0 %v1184
    %1194 = vmatmul.bf16.gmra.mxu0 %v1181
    %v1195 = vpop.f32.mrf.mxu0
    %v1196 = vadd.f32 0.0, %v1195
    %v1197 = vpop.f32.mrf.mxu0
    %1198 = vdwg.mxu0
    %v1200 = vunpack.c.l.b16 %v1126
    %v1201 = vpack.c.b16 %v1200, %v1200
    %1202 = vrot.lane.b32.xlu0 %v1201, 64
    %v1203 = vpop.permute.xlu0 %1202
    %v1205 = vsel %vm245, %v1126, 0
    %v1208 = vsel %vm245, %v1203, 0
    %1210 = vmatpush.bf16.xpose.msra.mxu0 0
    %1211 = vmatpush.bf16.xpose.msra.mxu0 0
    %1212 = vmatpush.bf16.xpose.msra.mxu0 0
    %1213 = vmatpush.bf16.xpose.msra.mxu0 0
    %1214 = vmatpush.bf16.xpose.msra.mxu0 0
    %1215 = vmatpush.bf16.xpose.msra.mxu0 0
    %1216 = vmatpush.bf16.xpose.msra.mxu0 0
    %1217 = vmatpush.bf16.xpose.msra.mxu0 %v1208
    %1218 = vmatmul.bf16.gmra.mxu0 %v1205
    %v1219 = vpop.f32.mrf.mxu0
    %v1220 = vadd.f32 0.0, %v1219
    %v1221 = vpop.f32.mrf.mxu0
    %1222 = vdwg.mxu0
    %v1223 = vmul.f32 %v1148, 0.17677669
    %v1224 = vmul.f32 %v1172, 0.17677669
    %v1225 = vmul.f32 %v1196, 0.17677669
    %v1226 = vmul.f32 %v1220, 0.17677669
    %v1227 = vadd.f32 %v1223, %v66
    %v1228 = vadd.f32 %v1224, %v67
    %v1229 = vadd.f32 %v1225, %v68
    %v1230 = vadd.f32 %v1226, %v69
    %v1231 = vsel %vm345, %v1227, -inf
    %1232 = vmax.xlane.f32.xlu0 %v1231
    %v1233 = vpop.xlane.xlu0 %1232
    %v1234 = vsel %vm345, %v1228, -inf
    %1235 = vmax.xlane.f32.xlu0 %v1234
    %v1236 = vpop.xlane.xlu0 %1235
    %v1237 = vsel %vm345, %v1229, -inf
    %1238 = vmax.xlane.f32.xlu0 %v1237
    %v1239 = vpop.xlane.xlu0 %1238
    %v1240 = vsel %vm345, %v1230, -inf
    %1241 = vmax.xlane.f32.xlu0 %v1240
    %v1242 = vpop.xlane.xlu0 %1241
    %v1243 = vsub.f32 %v1227, %v1233
    %v1244 = vsub.f32 %v1228, %v1236
    %v1245 = vsub.f32 %v1229, %v1239
    %v1246 = vsub.f32 %v1230, %v1242
    %v1247 = vmul.f32 %v1243, 1.442695
    %v1248 = vpow.pop %v1247
    %v1249 = vmul.f32 %v1244, 1.442695
    %v1250 = vpow.pop %v1249
    %v1251 = vmul.f32 %v1245, 1.442695
    %v1252 = vpow.pop %v1251
    %v1253 = vmul.f32 %v1246, 1.442695
    %v1254 = vpow.pop %v1253
    %v1255 = vsel %vm345, %v1248, 0.0
    %1256 = vadd.xlane.f32.xlu0 %v1255
    %v1257 = vpop.xlane.xlu0 %1256
    %v1258 = vsel %vm345, %v1250, 0.0
    %1259 = vadd.xlane.f32.xlu0 %v1258
    %v1260 = vpop.xlane.xlu0 %1259
    %v1261 = vsel %vm345, %v1252, 0.0
    %1262 = vadd.xlane.f32.xlu0 %v1261
    %v1263 = vpop.xlane.xlu0 %1262
    %v1264 = vsel %vm345, %v1254, 0.0
    %1265 = vadd.xlane.f32.xlu0 %v1264
    %v1266 = vpop.xlane.xlu0 %1265
    %v1267 = vrcp.pop %v1257
    %v1268 = vrcp.pop %v1260
    %v1269 = vrcp.pop %v1263
    %v1270 = vrcp.pop %v1266
    %v1271 = vmul.f32 %v1248, %v1267
    %v1272 = vmul.f32 %v1250, %v1268
    %v1273 = vmul.f32 %v1252, %v1269
    %v1274 = vmul.f32 %v1254, %v1270
    %v1275 = vpack.c.bf16 %v1271, %v1271
    %v1276 = vpack.c.bf16 %v1272, %v1272
    %v1277 = vpack.c.bf16 %v1273, %v1273
    %v1278 = vpack.c.bf16 %v1274, %v1274
    %v1279 = vpack.c.bf16 %v1103, %v1103
    %v1280 = vpack.c.bf16 %v1117, %v1117
    %v1281 = vpack.c.bf16 %v1105, %v1105
    %v1282 = vpack.c.bf16 %v1121, %v1121
    %v1284 = vsel %vm345, %v1275, 0
    %v1287 = vsel %vm401, %v1279, 0
    %1289 = vmatpush.bf16.msra.mxu0 0
    %1290 = vmatpush.bf16.msra.mxu0 0
    %1291 = vmatpush.bf16.msra.mxu0 0
    %1292 = vmatpush.bf16.msra.mxu0 0
    %1293 = vmatpush.bf16.msra.mxu0 0
    %1294 = vmatpush.bf16.msra.mxu0 0
    %1295 = vmatpush.bf16.msra.mxu0 0
    %1296 = vmatpush.bf16.msra.mxu0 %v1287
    %1297 = vmatmul.bf16.gmra.mxu0 %v1284
    %v1298 = vpop.f32.mrf.mxu0
    %v1299 = vadd.f32 0.0, %v1298
    %v1300 = vpop.f32.mrf.mxu0
    %1301 = vdwg.mxu0
    %v1303 = vsel %vm345, %v1276, 0
    %v1306 = vsel %vm401, %v1280, 0
    %1308 = vmatpush.bf16.msra.mxu0 0
    %1309 = vmatpush.bf16.msra.mxu0 0
    %1310 = vmatpush.bf16.msra.mxu0 0
    %1311 = vmatpush.bf16.msra.mxu0 0
    %1312 = vmatpush.bf16.msra.mxu0 0
    %1313 = vmatpush.bf16.msra.mxu0 0
    %1314 = vmatpush.bf16.msra.mxu0 0
    %1315 = vmatpush.bf16.msra.mxu0 %v1306
    %1316 = vmatmul.bf16.gmra.mxu0 %v1303
    %v1317 = vpop.f32.mrf.mxu0
    %v1318 = vadd.f32 0.0, %v1317
    %v1319 = vpop.f32.mrf.mxu0
    %1320 = vdwg.mxu0
    %v1322 = vsel %vm345, %v1277, 0
    %v1325 = vsel %vm401, %v1281, 0
    %1327 = vmatpush.bf16.msra.mxu0 0
    %1328 = vmatpush.bf16.msra.mxu0 0
    %1329 = vmatpush.bf16.msra.mxu0 0
    %1330 = vmatpush.bf16.msra.mxu0 0
    %1331 = vmatpush.bf16.msra.mxu0 0
    %1332 = vmatpush.bf16.msra.mxu0 0
    %1333 = vmatpush.bf16.msra.mxu0 0
    %1334 = vmatpush.bf16.msra.mxu0 %v1325
    %1335 = vmatmul.bf16.gmra.mxu0 %v1322
    %v1336 = vpop.f32.mrf.mxu0
    %v1337 = vadd.f32 0.0, %v1336
    %v1338 = vpop.f32.mrf.mxu0
    %1339 = vdwg.mxu0
    %v1341 = vsel %vm345, %v1278, 0
    %v1344 = vsel %vm401, %v1282, 0
    %1346 = vmatpush.bf16.msra.mxu0 0
    %1347 = vmatpush.bf16.msra.mxu0 0
    %1348 = vmatpush.bf16.msra.mxu0 0
    %1349 = vmatpush.bf16.msra.mxu0 0
    %1350 = vmatpush.bf16.msra.mxu0 0
    %1351 = vmatpush.bf16.msra.mxu0 0
    %1352 = vmatpush.bf16.msra.mxu0 0
    %1353 = vmatpush.bf16.msra.mxu0 %v1344
    %1354 = vmatmul.bf16.gmra.mxu0 %v1341
    %v1355 = vpop.f32.mrf.mxu0
    %v1356 = vadd.f32 0.0, %v1355
    %v1357 = vpop.f32.mrf.mxu0
    %1358 = vdwg.mxu0
    %v1359 = vpack.c.bf16 %v1299, %v1299
    %v1360 = vpack.c.bf16 %v1318, %v1318
    %v1361 = vpack.c.bf16 %v1337, %v1337
    %v1362 = vpack.c.bf16 %v1356, %v1356
    %s1363 = scalar_lea.vmem %s8, 64
    %v1364 = vld [vmem:[%s1363] sm:$0xf]
    %v1365 = vld [vmem:[%s1363 + $0x4] sm:$0xf]
    %v1366 = vld [vmem:[%s1363 + $0x8] sm:$0xf]
    %v1367 = vld [vmem:[%s1363 + $0xc] sm:$0xf]
    %v1368 = vld [vmem:[%s1363 + $0x10] sm:$0xf]
    %v1369 = vld [vmem:[%s1363 + $0x14] sm:$0xf]
    %v1370 = vld [vmem:[%s1363 + $0x18] sm:$0xf]
    %v1371 = vld [vmem:[%s1363 + $0x1c] sm:$0xf]
    %v1372 = vld [vmem:[%s1363 + $0x20] sm:$0xf]
    %v1373 = vld [vmem:[%s1363 + $0x24] sm:$0xf]
    %v1374 = vld [vmem:[%s1363 + $0x28] sm:$0xf]
    %v1375 = vld [vmem:[%s1363 + $0x2c] sm:$0xf]
    %v1376 = vld [vmem:[%s1363 + $0x30] sm:$0xf]
    %v1377 = vld [vmem:[%s1363 + $0x34] sm:$0xf]
    %v1378 = vld [vmem:[%s1363 + $0x38] sm:$0xf]
    %v1379 = vld [vmem:[%s1363 + $0x3c] sm:$0xf]
    %v1384 = vunpack.c.l.b16 %v1364
    %v1385 = vunpack.c.l.b16 %v1365
    %v1386 = vunpack.c.l.b16 %v1366
    %v1387 = vunpack.c.l.b16 %v1367
    %v1388 = vpack.c.b16 %v1385, %v1384
    %v1389 = vpack.c.b16 %v1387, %v1386
    %v1393 = vsel %vm245, %v1359, 0
    %1395 = vmatpush.bf16.msra.mxu0 0
    %1396 = vmatpush.bf16.msra.mxu0 0
    %1397 = vmatpush.bf16.msra.mxu0 0
    %1398 = vmatpush.bf16.msra.mxu0 0
    %1399 = vmatpush.bf16.msra.mxu0 0
    %1400 = vmatpush.bf16.msra.mxu0 0
    %1401 = vmatpush.bf16.msra.mxu0 %v1389
    %1402 = vmatpush.bf16.msra.mxu0 %v1388
    %1403 = vmatmul.bf16.gmra.mxu0 %v1393
    %v1404 = vpop.f32.mrf.mxu0
    %v1405 = vadd.f32 0.0, %v1404
    %v1406 = vpop.f32.mrf.mxu0
    %1407 = vdwg.mxu0
    %v1412 = vunpack.c.l.b16 %v1368
    %v1413 = vunpack.c.l.b16 %v1369
    %v1414 = vunpack.c.l.b16 %v1370
    %v1415 = vunpack.c.l.b16 %v1371
    %v1416 = vpack.c.b16 %v1413, %v1412
    %v1417 = vpack.c.b16 %v1415, %v1414
    %v1421 = vsel %vm245, %v1360, 0
    %1423 = vmatpush.bf16.msra.mxu0 0
    %1424 = vmatpush.bf16.msra.mxu0 0
    %1425 = vmatpush.bf16.msra.mxu0 0
    %1426 = vmatpush.bf16.msra.mxu0 0
    %1427 = vmatpush.bf16.msra.mxu0 0
    %1428 = vmatpush.bf16.msra.mxu0 0
    %1429 = vmatpush.bf16.msra.mxu0 %v1417
    %1430 = vmatpush.bf16.msra.mxu0 %v1416
    %1431 = vmatmul.bf16.gmra.mxu0 %v1421
    %v1432 = vpop.f32.mrf.mxu0
    %v1433 = vadd.f32 0.0, %v1432
    %v1434 = vpop.f32.mrf.mxu0
    %1435 = vdwg.mxu0
    %v1440 = vunpack.c.l.b16 %v1372
    %v1441 = vunpack.c.l.b16 %v1373
    %v1442 = vunpack.c.l.b16 %v1374
    %v1443 = vunpack.c.l.b16 %v1375
    %v1444 = vpack.c.b16 %v1441, %v1440
    %v1445 = vpack.c.b16 %v1443, %v1442
    %v1449 = vsel %vm245, %v1361, 0
    %1451 = vmatpush.bf16.msra.mxu0 0
    %1452 = vmatpush.bf16.msra.mxu0 0
    %1453 = vmatpush.bf16.msra.mxu0 0
    %1454 = vmatpush.bf16.msra.mxu0 0
    %1455 = vmatpush.bf16.msra.mxu0 0
    %1456 = vmatpush.bf16.msra.mxu0 0
    %1457 = vmatpush.bf16.msra.mxu0 %v1445
    %1458 = vmatpush.bf16.msra.mxu0 %v1444
    %1459 = vmatmul.bf16.gmra.mxu0 %v1449
    %v1460 = vpop.f32.mrf.mxu0
    %v1461 = vadd.f32 0.0, %v1460
    %v1462 = vpop.f32.mrf.mxu0
    %1463 = vdwg.mxu0
    %v1468 = vunpack.c.l.b16 %v1376
    %v1469 = vunpack.c.l.b16 %v1377
    %v1470 = vunpack.c.l.b16 %v1378
    %v1471 = vunpack.c.l.b16 %v1379
    %v1472 = vpack.c.b16 %v1469, %v1468
    %v1473 = vpack.c.b16 %v1471, %v1470
    %v1477 = vsel %vm245, %v1362, 0
    %1479 = vmatpush.bf16.msra.mxu0 0
    %1480 = vmatpush.bf16.msra.mxu0 0
    %1481 = vmatpush.bf16.msra.mxu0 0
    %1482 = vmatpush.bf16.msra.mxu0 0
    %1483 = vmatpush.bf16.msra.mxu0 0
    %1484 = vmatpush.bf16.msra.mxu0 0
    %1485 = vmatpush.bf16.msra.mxu0 %v1473
    %1486 = vmatpush.bf16.msra.mxu0 %v1472
    %1487 = vmatmul.bf16.gmra.mxu0 %v1477
    %v1488 = vpop.f32.mrf.mxu0
    %v1489 = vadd.f32 0.0, %v1488
    %v1490 = vpop.f32.mrf.mxu0
    %1491 = vdwg.mxu0
    %v1492 = vadd.f32 %v1405, %v1433
    %v1493 = vadd.f32 %v1461, %v1489
    %v1494 = vadd.f32 %v959, %v1492
    %v1495 = vadd.f32 %v960, %v1493
    %s1496 = scalar_lea.vmem %s9, 1
    %v1497 = vld [vmem:[%s1496] sm:$0x1]
    %v1499 = vperm.slane %v1497, 0
    %v1501 = vadd.f32 %v1494, %v1499
    %v1502 = vadd.f32 %v1495, %v1499
    %s1503 = scalar_lea.vmem %s10, 1
    %v1504 = vld [vmem:[%s1503] sm:$0x1]
    %s1505 = scalar_lea.vmem %s11, 1
    %v1506 = vld [vmem:[%s1505] sm:$0x1]
    %v1507 = vsel %vm72, %v1501, 0.0
    %1508 = vadd.xlane.f32.xlu0 %v1507
    %v1509 = vpop.xlane.xlu0 %1508
    %v1510 = vsel %vm72, %v1502, 0.0
    %1511 = vadd.xlane.f32.xlu0 %v1510
    %v1512 = vpop.xlane.xlu0 %1511
    %v1513 = vmul.f32 %v1509, %v85
    %v1514 = vmul.f32 %v1512, %v85
    %v1515 = vsub.f32 %v1501, %v1513
    %v1516 = vsub.f32 %v1502, %v1514
    %v1517 = vmul.f32 %v1515, %v1515
    %v1518 = vmul.f32 %v1516, %v1516
    %v1519 = vsel %vm72, %v1517, 0.0
    %1520 = vadd.xlane.f32.xlu0 %v1519
    %v1521 = vpop.xlane.xlu0 %1520
    %v1522 = vsel %vm72, %v1518, 0.0
    %1523 = vadd.xlane.f32.xlu0 %v1522
    %v1524 = vpop.xlane.xlu0 %1523
    %v1525 = vmul.f32 %v1521, %v85
    %v1526 = vmul.f32 %v1524, %v85
    %v1527 = vadd.f32 %v1525, 1e-05
    %v1528 = vadd.f32 %v1526, 1e-05
    %v1529 = vrsqrt.pop %v1527
    %v1530 = vmul.f32 %v1529, %v1527
    %v1531 = vmul.f32 %v1530, %v1529
    %v1532 = vmul.f32 0.5, %v1531
    %v1533 = vsub.f32 1.5, %v1532
    %v1534 = vmul.f32 %v1529, %v1533
    %vm1535 = vweird.f32 %v1527
    %vm1536 = vweird.f32 %v1529
    %vm1537 = vmor %vm1535, %vm1536
    %v1538 = vsel %vm1537, %v1529, %v1534
    %v1539 = vrsqrt.pop %v1528
    %v1540 = vmul.f32 %v1539, %v1528
    %v1541 = vmul.f32 %v1540, %v1539
    %v1542 = vmul.f32 0.5, %v1541
    %v1543 = vsub.f32 1.5, %v1542
    %v1544 = vmul.f32 %v1539, %v1543
    %vm1545 = vweird.f32 %v1528
    %vm1546 = vweird.f32 %v1539
    %vm1547 = vmor %vm1545, %vm1546
    %v1548 = vsel %vm1547, %v1539, %v1544
    %v1549 = vmul.f32 %v1515, %v1538
    %v1550 = vmul.f32 %v1516, %v1548
    %v1552 = vperm.slane %v1504, 0
    %v1554 = vmul.f32 %v1549, %v1552
    %v1555 = vmul.f32 %v1550, %v1552
    %v1557 = vperm.slane %v1506, 0
    %v1559 = vadd.f32 %v1554, %v1557
    %v1560 = vadd.f32 %v1555, %v1557
    %v1561 = vpack.c.bf16 %v1560, %v1559
    %s1562 = scalar_lea.vmem %s12, 64
    %v1563 = vld [vmem:[%s1562] sm:$0xff]
    %v1564 = vld [vmem:[%s1562 + $0x8] sm:$0xff]
    %v1565 = vld [vmem:[%s1562 + $0x10] sm:$0xff]
    %v1566 = vld [vmem:[%s1562 + $0x18] sm:$0xff]
    %v1567 = vld [vmem:[%s1562 + $0x20] sm:$0xff]
    %v1568 = vld [vmem:[%s1562 + $0x28] sm:$0xff]
    %v1569 = vld [vmem:[%s1562 + $0x30] sm:$0xff]
    %v1570 = vld [vmem:[%s1562 + $0x38] sm:$0xff]
    %s1571 = scalar_lea.vmem %s13, 2
    %v1572 = vld [vmem:[%s1571] sm:$0x3]
    %v1574 = vperm.slane %v1572, 0
    %v1575 = vperm.slane %v1572, 1
    %v1586 = vunpack.c.l.b16 %v1563
    %v1587 = vunpack.c.h.b16 %v1563
    %v1588 = vunpack.c.l.b16 %v1564
    %v1589 = vunpack.c.h.b16 %v1564
    %v1590 = vunpack.c.l.b16 %v1565
    %v1591 = vunpack.c.h.b16 %v1565
    %v1592 = vunpack.c.l.b16 %v1566
    %v1593 = vunpack.c.h.b16 %v1566
    %v1594 = vunpack.c.l.b16 %v1567
    %v1595 = vunpack.c.h.b16 %v1567
    %v1596 = vunpack.c.l.b16 %v1568
    %v1597 = vunpack.c.h.b16 %v1568
    %v1598 = vunpack.c.l.b16 %v1569
    %v1599 = vunpack.c.h.b16 %v1569
    %v1600 = vunpack.c.l.b16 %v1570
    %v1601 = vunpack.c.h.b16 %v1570
    %v1602 = vpack.c.b16 %v1588, %v1586
    %v1603 = vpack.c.b16 %v1589, %v1587
    %v1604 = vpack.c.b16 %v1592, %v1590
    %v1605 = vpack.c.b16 %v1593, %v1591
    %v1606 = vpack.c.b16 %v1596, %v1594
    %v1607 = vpack.c.b16 %v1597, %v1595
    %v1608 = vpack.c.b16 %v1600, %v1598
    %v1609 = vpack.c.b16 %v1601, %v1599
    %v1619 = vsel %vm72, %v1561, 0
    %1621 = vmatpush.bf16.msra.mxu0 0
    %1622 = vmatpush.bf16.msra.mxu0 0
    %1623 = vmatpush.bf16.msra.mxu0 0
    %1624 = vmatpush.bf16.msra.mxu0 0
    %1625 = vmatpush.bf16.msra.mxu0 %v1608
    %1626 = vmatpush.bf16.msra.mxu0 %v1606
    %1627 = vmatpush.bf16.msra.mxu0 %v1604
    %1628 = vmatpush.bf16.msra.mxu0 %v1602
    %1629 = vmatmul.bf16.gmra.mxu0 %v1619
    %v1630 = vpop.f32.mrf.mxu0
    %v1631 = vadd.f32 %v1574, %v1630
    %v1632 = vpop.f32.mrf.mxu0
    %v1633 = vadd.f32 %v1574, %v1632
    %1634 = vdwg.mxu0
    %1635 = vmatpush.bf16.msra.mxu0 0
    %1636 = vmatpush.bf16.msra.mxu0 0
    %1637 = vmatpush.bf16.msra.mxu0 0
    %1638 = vmatpush.bf16.msra.mxu0 0
    %1639 = vmatpush.bf16.msra.mxu0 %v1609
    %1640 = vmatpush.bf16.msra.mxu0 %v1607
    %1641 = vmatpush.bf16.msra.mxu0 %v1605
    %1642 = vmatpush.bf16.msra.mxu0 %v1603
    %1643 = vmatmul.bf16.gmra.mxu0 %v1619
    %v1644 = vpop.f32.mrf.mxu0
    %v1645 = vadd.f32 %v1575, %v1644
    %v1646 = vpop.f32.mrf.mxu0
    %v1647 = vadd.f32 %v1575, %v1646
    %1648 = vdwg.mxu0
    %v1649 = vmul.f32 %v1631, 0.5
    %v1650 = vmul.f32 %v1645, 0.5
    %v1651 = vmul.f32 %v1633, 0.5
    %v1652 = vmul.f32 %v1647, 0.5
    %v1653 = vmul.f32 %v1631, 0.044715
    %v1654 = vmul.f32 %v1645, 0.044715
    %v1655 = vmul.f32 %v1633, 0.044715
    %v1656 = vmul.f32 %v1647, 0.044715
    %v1657 = vmul.f32 %v1653, %v1631
    %v1658 = vmul.f32 %v1654, %v1645
    %v1659 = vmul.f32 %v1655, %v1633
    %v1660 = vmul.f32 %v1656, %v1647
    %v1661 = vmul.f32 %v1657, %v1631
    %v1662 = vmul.f32 %v1658, %v1645
    %v1663 = vmul.f32 %v1659, %v1633
    %v1664 = vmul.f32 %v1660, %v1647
    %v1665 = vadd.f32 %v1631, %v1661
    %v1666 = vadd.f32 %v1645, %v1662
    %v1667 = vadd.f32 %v1633, %v1663
    %v1668 = vadd.f32 %v1647, %v1664
    %v1669 = vmul.f32 %v1665, 0.7978846
    %v1670 = vmul.f32 %v1666, 0.7978846
    %v1671 = vmul.f32 %v1667, 0.7978846
    %v1672 = vmul.f32 %v1668, 0.7978846
    %v1673 = vtanh.pop %v1669
    %v1674 = vtanh.pop %v1670
    %v1675 = vtanh.pop %v1671
    %v1676 = vtanh.pop %v1672
    %v1677 = vadd.f32 %v1673, 1.0
    %v1678 = vadd.f32 %v1674, 1.0
    %v1679 = vadd.f32 %v1675, 1.0
    %v1680 = vadd.f32 %v1676, 1.0
    %v1681 = vmul.f32 %v1649, %v1677
    %v1682 = vmul.f32 %v1650, %v1678
    %v1683 = vmul.f32 %v1651, %v1679
    %v1684 = vmul.f32 %v1652, %v1680
    %v1685 = vpack.c.bf16 %v1683, %v1681
    %v1686 = vpack.c.bf16 %v1684, %v1682
    %s1687 = scalar_lea.vmem %s14, 128
    %v1688 = vld [vmem:[%s1687] sm:$0xf]
    %v1689 = vld [vmem:[%s1687 + $0x4] sm:$0xf]
    %v1690 = vld [vmem:[%s1687 + $0x8] sm:$0xf]
    %v1691 = vld [vmem:[%s1687 + $0xc] sm:$0xf]
    %v1692 = vld [vmem:[%s1687 + $0x10] sm:$0xf]
    %v1693 = vld [vmem:[%s1687 + $0x14] sm:$0xf]
    %v1694 = vld [vmem:[%s1687 + $0x18] sm:$0xf]
    %v1695 = vld [vmem:[%s1687 + $0x1c] sm:$0xf]
    %v1696 = vld [vmem:[%s1687 + $0x20] sm:$0xf]
    %v1697 = vld [vmem:[%s1687 + $0x24] sm:$0xf]
    %v1698 = vld [vmem:[%s1687 + $0x28] sm:$0xf]
    %v1699 = vld [vmem:[%s1687 + $0x2c] sm:$0xf]
    %v1700 = vld [vmem:[%s1687 + $0x30] sm:$0xf]
    %v1701 = vld [vmem:[%s1687 + $0x34] sm:$0xf]
    %v1702 = vld [vmem:[%s1687 + $0x38] sm:$0xf]
    %v1703 = vld [vmem:[%s1687 + $0x3c] sm:$0xf]
    %v1704 = vld [vmem:[%s1687 + $0x40] sm:$0xf]
    %v1705 = vld [vmem:[%s1687 + $0x44] sm:$0xf]
    %v1706 = vld [vmem:[%s1687 + $0x48] sm:$0xf]
    %v1707 = vld [vmem:[%s1687 + $0x4c] sm:$0xf]
    %v1708 = vld [vmem:[%s1687 + $0x50] sm:$0xf]
    %v1709 = vld [vmem:[%s1687 + $0x54] sm:$0xf]
    %v1710 = vld [vmem:[%s1687 + $0x58] sm:$0xf]
    %v1711 = vld [vmem:[%s1687 + $0x5c] sm:$0xf]
    %v1712 = vld [vmem:[%s1687 + $0x60] sm:$0xf]
    %v1713 = vld [vmem:[%s1687 + $0x64] sm:$0xf]
    %v1714 = vld [vmem:[%s1687 + $0x68] sm:$0xf]
    %v1715 = vld [vmem:[%s1687 + $0x6c] sm:$0xf]
    %v1716 = vld [vmem:[%s1687 + $0x70] sm:$0xf]
    %v1717 = vld [vmem:[%s1687 + $0x74] sm:$0xf]
    %v1718 = vld [vmem:[%s1687 + $0x78] sm:$0xf]
    %v1719 = vld [vmem:[%s1687 + $0x7c] sm:$0xf]
    %v1752 = vunpack.c.l.b16 %v1688
    %v1753 = vunpack.c.l.b16 %v1689
    %v1754 = vunpack.c.l.b16 %v1690
    %v1755 = vunpack.c.l.b16 %v1691
    %v1756 = vunpack.c.l.b16 %v1692
    %v1757 = vunpack.c.l.b16 %v1693
    %v1758 = vunpack.c.l.b16 %v1694
    %v1759 = vunpack.c.l.b16 %v1695
    %v1760 = vunpack.c.l.b16 %v1696
    %v1761 = vunpack.c.l.b16 %v1697
    %v1762 = vunpack.c.l.b16 %v1698
    %v1763 = vunpack.c.l.b16 %v1699
    %v1764 = vunpack.c.l.b16 %v1700
    %v1765 = vunpack.c.l.b16 %v1701
    %v1766 = vunpack.c.l.b16 %v1702
    %v1767 = vunpack.c.l.b16 %v1703
    %v1768 = vunpack.c.l.b16 %v1704
    %v1769 = vunpack.c.l.b16 %v1705
    %v1770 = vunpack.c.l.b16 %v1706
    %v1771 = vunpack.c.l.b16 %v1707
    %v1772 = vunpack.c.l.b16 %v1708
    %v1773 = vunpack.c.l.b16 %v1709
    %v1774 = vunpack.c.l.b16 %v1710
    %v1775 = vunpack.c.l.b16 %v1711
    %v1776 = vunpack.c.l.b16 %v1712
    %v1777 = vunpack.c.l.b16 %v1713
    %v1778 = vunpack.c.l.b16 %v1714
    %v1779 = vunpack.c.l.b16 %v1715
    %v1780 = vunpack.c.l.b16 %v1716
    %v1781 = vunpack.c.l.b16 %v1717
    %v1782 = vunpack.c.l.b16 %v1718
    %v1783 = vunpack.c.l.b16 %v1719
    %v1784 = vpack.c.b16 %v1753, %v1752
    %v1785 = vpack.c.b16 %v1755, %v1754
    %v1786 = vpack.c.b16 %v1757, %v1756
    %v1787 = vpack.c.b16 %v1759, %v1758
    %v1788 = vpack.c.b16 %v1761, %v1760
    %v1789 = vpack.c.b16 %v1763, %v1762
    %v1790 = vpack.c.b16 %v1765, %v1764
    %v1791 = vpack.c.b16 %v1767, %v1766
    %v1792 = vpack.c.b16 %v1769, %v1768
    %v1793 = vpack.c.b16 %v1771, %v1770
    %v1794 = vpack.c.b16 %v1773, %v1772
    %v1795 = vpack.c.b16 %v1775, %v1774
    %v1796 = vpack.c.b16 %v1777, %v1776
    %v1797 = vpack.c.b16 %v1779, %v1778
    %v1798 = vpack.c.b16 %v1781, %v1780
    %v1799 = vpack.c.b16 %v1783, %v1782
    %1816 = vmatpush.bf16.msra.mxu0 %v1791
    %1817 = vmatpush.bf16.msra.mxu0 %v1790
    %1818 = vmatpush.bf16.msra.mxu0 %v1789
    %1819 = vmatpush.bf16.msra.mxu0 %v1788
    %1820 = vmatpush.bf16.msra.mxu0 %v1787
    %1821 = vmatpush.bf16.msra.mxu0 %v1786
    %1822 = vmatpush.bf16.msra.mxu0 %v1785
    %1823 = vmatpush.bf16.msra.mxu0 %v1784
    %1824 = vmatmul.bf16.gmra.mxu0 %v1685
    %v1825 = vpop.f32.mrf.mxu0
    %v1826 = vadd.f32 0.0, %v1825
    %v1827 = vpop.f32.mrf.mxu0
    %v1828 = vadd.f32 0.0, %v1827
    %1829 = vdwg.mxu0
    %1830 = vmatpush.bf16.msra.mxu0 %v1799
    %1831 = vmatpush.bf16.msra.mxu0 %v1798
    %1832 = vmatpush.bf16.msra.mxu0 %v1797
    %1833 = vmatpush.bf16.msra.mxu0 %v1796
    %1834 = vmatpush.bf16.msra.mxu0 %v1795
    %1835 = vmatpush.bf16.msra.mxu0 %v1794
    %1836 = vmatpush.bf16.msra.mxu0 %v1793
    %1837 = vmatpush.bf16.msra.mxu0 %v1792
    %1838 = vmatmul.bf16.gmra.mxu0 %v1686
    %v1839 = vpop.f32.mrf.mxu0
    %v1840 = vadd.f32 %v1826, %v1839
    %v1841 = vpop.f32.mrf.mxu0
    %v1842 = vadd.f32 %v1828, %v1841
    %1843 = vdwg.mxu0
    %v1844 = vadd.f32 %v1501, %v1840
    %v1845 = vadd.f32 %v1502, %v1842
    %s1846 = scalar_lea.vmem %s15, 1
    %v1847 = vld [vmem:[%s1846] sm:$0x1]
    %v1849 = vperm.slane %v1847, 0
    %v1851 = vadd.f32 %v1844, %v1849
    %v1852 = vadd.f32 %v1845, %v1849
    %v1853 = vld [vmem:[%s16] sm:$0x1]
    %v1854 = vld [vmem:[%s17] sm:$0x1]
    %v1855 = vsel %vm72, %v1851, 0.0
    %1856 = vadd.xlane.f32.xlu0 %v1855
    %v1857 = vpop.xlane.xlu0 %1856
    %v1858 = vsel %vm72, %v1852, 0.0
    %1859 = vadd.xlane.f32.xlu0 %v1858
    %v1860 = vpop.xlane.xlu0 %1859
    %v1861 = vmul.f32 %v1857, %v85
    %v1862 = vmul.f32 %v1860, %v85
    %v1863 = vsub.f32 %v1851, %v1861
    %v1864 = vsub.f32 %v1852, %v1862
    %v1865 = vmul.f32 %v1863, %v1863
    %v1866 = vmul.f32 %v1864, %v1864
    %v1867 = vsel %vm72, %v1865, 0.0
    %1868 = vadd.xlane.f32.xlu0 %v1867
    %v1869 = vpop.xlane.xlu0 %1868
    %v1870 = vsel %vm72, %v1866, 0.0
    %1871 = vadd.xlane.f32.xlu0 %v1870
    %v1872 = vpop.xlane.xlu0 %1871
    %v1873 = vmul.f32 %v1869, %v85
    %v1874 = vmul.f32 %v1872, %v85
    %v1875 = vadd.f32 %v1873, 1e-05
    %v1876 = vadd.f32 %v1874, 1e-05
    %v1877 = vrsqrt.pop %v1875
    %v1878 = vmul.f32 %v1877, %v1875
    %v1879 = vmul.f32 %v1878, %v1877
    %v1880 = vmul.f32 0.5, %v1879
    %v1881 = vsub.f32 1.5, %v1880
    %v1882 = vmul.f32 %v1877, %v1881
    %vm1883 = vweird.f32 %v1875
    %vm1884 = vweird.f32 %v1877
    %vm1885 = vmor %vm1883, %vm1884
    %v1886 = vsel %vm1885, %v1877, %v1882
    %v1887 = vrsqrt.pop %v1876
    %v1888 = vmul.f32 %v1887, %v1876
    %v1889 = vmul.f32 %v1888, %v1887
    %v1890 = vmul.f32 0.5, %v1889
    %v1891 = vsub.f32 1.5, %v1890
    %v1892 = vmul.f32 %v1887, %v1891
    %vm1893 = vweird.f32 %v1876
    %vm1894 = vweird.f32 %v1887
    %vm1895 = vmor %vm1893, %vm1894
    %v1896 = vsel %vm1895, %v1887, %v1892
    %v1897 = vmul.f32 %v1863, %v1886
    %v1898 = vmul.f32 %v1864, %v1896
    %v1900 = vperm.slane %v1853, 0
    %v1902 = vmul.f32 %v1897, %v1900
    %v1903 = vmul.f32 %v1898, %v1900
    %v1905 = vperm.slane %v1854, 0
    %v1907 = vadd.f32 %v1902, %v1905
    %v1908 = vadd.f32 %v1903, %v1905
    %v1909 = vpack.c.bf16 %v1908, %v1907
    %v1910 = vld [vmem:[%s18] sm:$0xf]
    %v1911 = vld [vmem:[%s18 + $0x4] sm:$0xf]
    %v1912 = vld [vmem:[%s18 + $0x8] sm:$0xf]
    %v1913 = vld [vmem:[%s18 + $0xc] sm:$0xf]
    %v1914 = vld [vmem:[%s18 + $0x10] sm:$0xf]
    %v1915 = vld [vmem:[%s18 + $0x14] sm:$0xf]
    %v1916 = vld [vmem:[%s18 + $0x18] sm:$0xf]
    %v1917 = vld [vmem:[%s18 + $0x1c] sm:$0xf]
    %v1926 = vunpack.c.l.b16 %v1910
    %v1927 = vunpack.c.l.b16 %v1911
    %v1928 = vunpack.c.l.b16 %v1912
    %v1929 = vunpack.c.l.b16 %v1913
    %v1930 = vunpack.c.l.b16 %v1914
    %v1931 = vunpack.c.l.b16 %v1915
    %v1932 = vunpack.c.l.b16 %v1916
    %v1933 = vunpack.c.l.b16 %v1917
    %v1934 = vpack.c.b16 %v1927, %v1926
    %v1935 = vpack.c.b16 %v1929, %v1928
    %v1936 = vpack.c.b16 %v1931, %v1930
    %v1937 = vpack.c.b16 %v1933, %v1932
    %v1943 = vsel %vm72, %v1909, 0
    %1945 = vmatpush.bf16.msra.mxu0 0
    %1946 = vmatpush.bf16.msra.mxu0 0
    %1947 = vmatpush.bf16.msra.mxu0 0
    %1948 = vmatpush.bf16.msra.mxu0 0
    %1949 = vmatpush.bf16.msra.mxu0 %v1937
    %1950 = vmatpush.bf16.msra.mxu0 %v1936
    %1951 = vmatpush.bf16.msra.mxu0 %v1935
    %1952 = vmatpush.bf16.msra.mxu0 %v1934
    %1953 = vmatmul.bf16.gmra.mxu0 %v1943
    %v1954 = vpop.f32.mrf.mxu0
    %v1955 = vadd.f32 0.0, %v1954
    %v1956 = vpop.f32.mrf.mxu0
    %v1957 = vadd.f32 0.0, %v1956
    %1958 = vdwg.mxu0
    %1959 = vmax.xlane.f32.xlu0 %v1955
    %v1960 = vpop.xlane.xlu0 %1959
    %1961 = vmax.xlane.f32.xlu0 %v1957
    %v1962 = vpop.xlane.xlu0 %1961
    %v1963 = vsub.f32 %v1955, %v1960
    %v1964 = vsub.f32 %v1957, %v1962
    %v1965 = vmul.f32 %v1963, 1.442695
    %v1966 = vpow.pop %v1965
    %v1967 = vmul.f32 %v1964, 1.442695
    %v1968 = vpow.pop %v1967
    %1969 = vadd.xlane.f32.xlu0 %v1966
    %v1970 = vpop.xlane.xlu0 %1969
    %1971 = vadd.xlane.f32.xlu0 %v1968
    %v1972 = vpop.xlane.xlu0 %1971
    %v1973 = vlog2.pop %v1970
    %v1974 = vmul.f32 %v1973, 0.6931472
    %v1975 = vlog2.pop %v1972
    %v1976 = vmul.f32 %v1975, 0.6931472
    %v1977 = vadd.f32 %v1960, %v1974
    %v1978 = vadd.f32 %v1962, %v1976
    %v1979 = vlaneseq
    %v1980 = vand.u32 %v1979, 127
    %v1981 = vld [vmem:[%s2] sm:$0xff]
    %v1982 = vld [vmem:[%s2 + $0x8] sm:$0xff]
    %1983 = vset.pattern.permute.xlu0 0
    %1984 = vperm.xlu0 %1983, %v1981
    %v1985 = vpop.permute.xlu0 %1984
    %1986 = vset.pattern.permute.xlu0 0
    %1987 = vperm.xlu0 %1986, %v1982
    %v1988 = vpop.permute.xlu0 %1987
    %vm1989 = vcmp.eq.s32.totalorder %v1980, %v1985
    %vm1990 = vcmp.eq.s32.totalorder %v1980, %v1988
    %v1991 = vsel %vm1989, %v1955, 0.0
    %v1992 = vsel %vm1990, %v1957, 0.0
    %1993 = vadd.xlane.f32.xlu0 %v1991
    %v1994 = vpop.xlane.xlu0 %1993
    %1995 = vadd.xlane.f32.xlu0 %v1992
    %v1996 = vpop.xlane.xlu0 %1995
    %v1997 = vld [vmem:[%s3] sm:$0xff]
    %v1998 = vld [vmem:[%s3 + $0x8] sm:$0xff]
    %v1999 = vsub.f32 %v1977, %v1994
    %v2000 = vsub.f32 %v1978, %v1996
    %v2001 = vmul.f32 %v1999, %v1997
    %v2002 = vmul.f32 %v2000, %v1998
    %vm2003 = vcmask 7168
    %v2004 = vsel %vm2003, %v2001, 0.0
    %v2005 = vsel %vm2003, %v2002, 0.0
    %v2006 = vadd.f32 %v2004, %v2005
    %2007 = vadd.xlane.f32.xlu0 %v2006
    %v2008 = vpop.xlane.xlu0 %2007
    %v2009 = vrot.slane %v2008, 4
    %v2010 = vadd.f32 %v2008, %v2009
    %v2011 = vrot.slane %v2010, 2
    %v2012 = vadd.f32 %v2010, %v2011
    %v2013 = vrot.slane %v2012, 1
    %v2014 = vadd.f32 %v2012, %v2013
    %s2015 = vtos %v2014
    %v2016 = vstv %s2015
    %v2017 = vsel %vm2003, %v1997, 0.0
    %v2018 = vsel %vm2003, %v1998, 0.0
    %v2019 = vadd.f32 %v2017, %v2018
    %2020 = vadd.xlane.f32.xlu0 %v2019
    %v2021 = vpop.xlane.xlu0 %2020
    %v2022 = vrot.slane %v2021, 4
    %v2023 = vadd.f32 %v2021, %v2022
    %v2024 = vrot.slane %v2023, 2
    %v2025 = vadd.f32 %v2023, %v2024
    %v2026 = vrot.slane %v2025, 1
    %v2027 = vadd.f32 %v2025, %v2026
    %s2028 = vtos %v2027
    %v2029 = vstv %s2028
    %v2030 = vrcp.pop %v2029
    %v2031 = vmul.f32 %v2016, %v2030
    %vm2032 = vcmask 0
    %2033 = vst.msk [vmem:[#allocation2] sm:$0x1] %vm2032, %v2031
    // Predicated region
    $region78: #{generator_forward.1} parent=1 // pred_check
      _
    $region79: #{generator_forward.1} parent=1 // pred_check_branch
      %2035 = sbr.rel (0) target = $region81
    $region80: #{generator_forward.1} parent=1 // pred_region
      %2037 = vsyncadd [#allocation3], 0
      %s2039 = sshll.u32 [#allocation2], 4
      %s2040 = int_to_ptr.vmem [resolvable:$true] %s2039
      %s2041 = sshll.u32 %s19, 4
      %s2042 = int_to_ptr.hbm [resolvable:$true] %s2041
      %2044 = dma.vmem_to_hbm [thread:$0]  %s2040, 16, %s2042, [#allocation3]
    $region81: #{generator_forward.1} parent=1 // pred_fallthru
      _
    // Predicated region
    $region82: #{generator_forward.1} parent=1 // pred_check
      _
    $region83: #{generator_forward.1} parent=1 // pred_check_branch
      %2046 = sbr.rel (0) target = $region85
    $region84: #{generator_forward.1} parent=1 // pred_region
      %2048 = dma.done [#allocation3], 16
    $region85: #{generator_forward.1} parent=1 // pred_fallthru
      _
    %2049 = vsyncpa [#allocation3], 1

</llo_original>
